<compile_context>
chip_gen: v7x
topology: tpu7x:2x2x1
jax: 0.10.0
libtpu: 0.0.40
codegen_flags: <defaults>
</compile_context>

<pallas_src>
import math
from functools import partial

import jax
import jax.numpy as jnp
from jax.experimental import pallas as pl
from jax.experimental.pallas import tpu as pltpu


def _layer_norm(x, gamma, beta, eps=1e-5):
    # PyTorch nn.LayerNorm: biased variance over last dim, eps inside the sqrt.
    mu = jnp.mean(x, axis=-1, keepdims=True)
    xc = x - mu
    var = jnp.mean(xc * xc, axis=-1, keepdims=True)
    return xc * jax.lax.rsqrt(var + eps) * gamma + beta


def van_layer_kernel(
    xq_ref, xkv_ref,
    ln1_g_ref, ln1_b_ref,
    wq_ref, wk_ref, wv_ref, wo_ref,
    ln2_g_ref, ln2_b_ref,
    w1_ref, b1_ref, w2_ref, b2_ref,
    o_ref,
    *, num_heads, kv_block,
):
    f32 = jnp.float32
    bf16 = jnp.bfloat16

    xq = xq_ref[0].astype(f32)       # (TQ, D) query / residual tile
    xkv = xkv_ref[0].astype(f32)     # (S, D)  full sequence -> K/V source
    TQ, D = xq.shape
    S = xkv.shape[0]
    scale = 1.0 / math.sqrt(D)       # VanAttention divides by sqrt(model_dims), not head_dim

    # ---- pre-attention LayerNorm (f32 stats), hoisted gamma/beta ----
    ln1_g = ln1_g_ref[0]
    ln1_b = ln1_b_ref[0]
    nxq_b = _layer_norm(xq, ln1_g, ln1_b).astype(bf16)     # (TQ, D)
    nxkv_b = _layer_norm(xkv, ln1_g, ln1_b).astype(bf16)   # (S, D)

    num_kv = S // kv_block

    # ---- multi-head self-attention ----
    # Output projection is accumulated per head (replaces combine_heads + concat):
    #   concat_h(ctx_h) @ Wo^T == sum_h ctx_h @ Wo^T[h*hd:(h+1)*hd, :]
    attn = jnp.zeros((TQ, D), f32)
    for h in range(num_heads):  # static loop; MXU iterates heads either way (no relayouts)
        # Per-head projections with pre-split weights: no lane slicing of activations.
        qh = jnp.dot(nxq_b, wq_ref[h], preferred_element_type=f32).astype(bf16)    # (TQ, hd)
        kh = jnp.dot(nxkv_b, wk_ref[h], preferred_element_type=f32).astype(bf16)   # (S, hd)
        vh = jnp.dot(nxkv_b, wv_ref[h], preferred_element_type=f32).astype(bf16)   # (S, hd)
        hd = qh.shape[-1]

        # Flash-style online softmax over KV blocks (bounded score footprint).
        m_i = jnp.full((TQ, 1), -jnp.inf, f32)
        l_i = jnp.zeros((TQ, 1), f32)
        acc = jnp.zeros((TQ, hd), f32)
        for kb in range(num_kv):
            k_blk = kh[kb * kv_block:(kb + 1) * kv_block]   # (TK, hd)
            v_blk = vh[kb * kv_block:(kb + 1) * kv_block]   # (TK, hd)
            # q @ k^T as an NT dot_general (no explicit transpose materialized).
            s = jax.lax.dot_general(
                qh, k_blk, (((1,), (1,)), ((), ())),
                preferred_element_type=f32) * scale          # (TQ, TK), f32
            m_new = jnp.maximum(m_i, jnp.max(s, axis=-1, keepdims=True))
            alpha = jnp.exp(m_i - m_new)
            p = jnp.exp(s - m_new)
            l_i = alpha * l_i + jnp.sum(p, axis=-1, keepdims=True)
            acc = alpha * acc + jnp.dot(p.astype(bf16), v_blk,
                                        preferred_element_type=f32)
            m_i = m_new

        ctx = acc * pl.reciprocal(l_i, approx=True)          # softmax normalize on the EUP
        attn = attn + jnp.dot(ctx.astype(bf16), wo_ref[h],
                              preferred_element_type=f32)    # (TQ, D)

    # ---- first residual (f32) ----
    x1 = xq + attn

    # ---- pre-FF LayerNorm + feed-forward (bf16 matmul operands, f32 accumulate) ----
    nx2_b = _layer_norm(x1, ln2_g_ref[0], ln2_b_ref[0]).astype(bf16)
    h1 = jnp.dot(nx2_b, w1_ref[...], preferred_element_type=f32) + b1_ref[0]
    h1 = jnp.maximum(h1, 0.0)
    h2 = jnp.dot(h1.astype(bf16), w2_ref[...], preferred_element_type=f32) + b2_ref[0]

    # ---- second residual ----
    o_ref[0] = (x1 + h2).astype(o_ref.dtype)


def _pick_q_tile(S, target):
    """Largest multiple-of-8 divisor of S that is <= target (else full S)."""
    if S <= target:
        return S
    best = None
    for t in range(8, target + 1, 8):
        if S % t == 0:
            best = t
    return best if best is not None else S


def van_layer_pallas(x, params, num_heads, *, q_block=256, kv_block=512):
    B, S, D = x.shape
    assert D % num_heads == 0
    hd = D // num_heads
    (ln1_g, ln1_b, wq_t, wk_t, wv_t, wo_t,
     ln2_g, ln2_b, w1_t, b1, w2_t, b2) = params

    bf16 = jnp.bfloat16
    # Pre-split per-head projection weights (host-side, trace time):
    #   wq_h[h] = wq_t[:, h*hd:(h+1)*hd]  (D, hd);  wo_h[h] = wo_t[h*hd:(h+1)*hd, :] (hd, D)
    wq_h = jnp.transpose(wq_t.reshape(D, num_heads, hd), (1, 0, 2)).astype(bf16)
    wk_h = jnp.transpose(wk_t.reshape(D, num_heads, hd), (1, 0, 2)).astype(bf16)
    wv_h = jnp.transpose(wv_t.reshape(D, num_heads, hd), (1, 0, 2)).astype(bf16)
    wo_h = wo_t.reshape(num_heads, hd, D).astype(bf16)
    w1_b = w1_t.astype(bf16)
    w2_b = w2_t.astype(bf16)

    # Tiling: query tiles go on the grid; KV blocks are an in-kernel loop.
    TQ = _pick_q_tile(S, q_block)
    TK = kv_block if S % kv_block == 0 else S
    num_q = S // TQ

    weight_args = [ln1_g, ln1_b, wq_h, wk_h, wv_h, wo_h,
                   ln2_g, ln2_b, w1_b, b1, w2_b, b2]

    def full_spec(arr):
        nd = arr.ndim
        return pl.BlockSpec(arr.shape, lambda b, i, _nd=nd: (0,) * _nd)

    in_specs = [
        pl.BlockSpec((1, TQ, D), lambda b, i: (b, i, 0)),   # query / residual tile
        pl.BlockSpec((1, S, D), lambda b, i: (b, 0, 0)),    # full sequence (K/V source)
    ]
    in_specs += [full_spec(a) for a in weight_args]

    # VMEM budget: above the 32 MiB scoped default, below v7x's 64 MiB physical.
    try:
        vmem_cap = pltpu.get_tpu_info().vmem_capacity_bytes
        vmem_limit = min(int(0.75 * vmem_cap), 96 * 1024 * 1024)
    except Exception:
        vmem_limit = 48 * 1024 * 1024

    # Advisory cost estimate for XLA scheduling around the custom call.
    flops = int(B * (24 * S * D * D + 4 * S * S * D))
    transcendentals = int(B * num_heads * S * S)
    bytes_accessed = int(8 * B * S * D
                         + sum(int(a.size) * a.dtype.itemsize for a in weight_args))

    kernel = partial(van_layer_kernel, num_heads=num_heads, kv_block=TK)

    return pl.pallas_call(
        kernel,
        out_shape=jax.ShapeDtypeStruct((B, S, D), x.dtype),
        grid_spec=pltpu.PrefetchScalarGridSpec(
            num_scalar_prefetch=0,
            grid=(B, num_q),
            in_specs=in_specs,
            out_specs=pl.BlockSpec((1, TQ, D), lambda b, i: (b, i, 0)),
        ),
        compiler_params=pltpu.CompilerParams(
            dimension_semantics=("parallel", "parallel"),
            vmem_limit_bytes=vmem_limit,
        ),
        cost_estimate=pl.CostEstimate(
            flops=flops, transcendentals=transcendentals,
            bytes_accessed=bytes_accessed),
    )(x, x, *weight_args)


def van_layer_reference(x, params, num_heads):
    """Pure-JAX f32 reference mirroring the PyTorch forward (eval mode)."""
    (ln1_g, ln1_b, wq_t, wk_t, wv_t, wo_t,
     ln2_g, ln2_b, w1_t, b1, w2_t, b2) = params
    B, S, D = x.shape
    hd = D // num_heads

    def ln(v, g, b):
        mu = jnp.mean(v, axis=-1, keepdims=True)
        var = jnp.mean((v - mu) ** 2, axis=-1, keepdims=True)
        return (v - mu) / jnp.sqrt(var + 1e-5) * g + b

    nx = ln(x, ln1_g[0], ln1_b[0])
    q = (nx @ wq_t).reshape(B, S, num_heads, hd).transpose(0, 2, 1, 3)
    k = (nx @ wk_t).reshape(B, S, num_heads, hd).transpose(0, 2, 1, 3)
    v = (nx @ wv_t).reshape(B, S, num_heads, hd).transpose(0, 2, 1, 3)
    scores = jnp.einsum("bhqd,bhkd->bhqk", q, k) / jnp.sqrt(jnp.float32(D))
    w = jax.nn.softmax(scores, axis=-1)
    res = jnp.einsum("bhqk,bhkd->bhqd", w, v).transpose(0, 2, 1, 3).reshape(B, S, D)
    res = res @ wo_t
    x1 = x + res
    nx2 = ln(x1, ln2_g[0], ln2_b[0])
    ff = jnp.maximum(nx2 @ w1_t + b1[0], 0.0) @ w2_t + b2[0]
    return x1 + ff


if __name__ == "__main__":
    B, S, D, H = 2, 8, 32, 4  # batch, seq, model_dims, heads
    key = jax.random.PRNGKey(0)
    ks = jax.random.split(key, 12)

    # Deterministic synthetic parameters (shapes from VanLayer.__init__).
    ln1_g = 1.0 + 0.1 * jax.random.normal(ks[0], (1, D), jnp.float32)
    ln1_b = 0.1 * jax.random.normal(ks[1], (1, D), jnp.float32)
    ln2_g = 1.0 + 0.1 * jax.random.normal(ks[2], (1, D), jnp.float32)
    ln2_b = 0.1 * jax.random.normal(ks[3], (1, D), jnp.float32)
    # Linear weights stored as (in, out) == PyTorch weight.T
    wq_t = 0.05 * jax.random.normal(ks[4], (D, D), jnp.float32)
    wk_t = 0.05 * jax.random.normal(ks[5], (D, D), jnp.float32)
    wv_t = 0.05 * jax.random.normal(ks[6], (D, D), jnp.float32)
    wo_t = 0.05 * jax.random.normal(ks[7], (D, D), jnp.float32)
    w1_t = 0.05 * jax.random.normal(ks[8], (D, 4 * D), jnp.float32)
    b1 = 0.05 * jax.random.normal(ks[9], (1, 4 * D), jnp.float32)
    w2_t = 0.05 * jax.random.normal(ks[10], (4 * D, D), jnp.float32)
    b2 = 0.05 * jax.random.normal(ks[11], (1, D), jnp.float32)

    params = (ln1_g, ln1_b, wq_t, wk_t, wv_t, wo_t,
              ln2_g, ln2_b, w1_t, b1, w2_t, b2)

    x = jax.random.normal(jax.random.PRNGKey(42), (B, S, D), jnp.float32)

    out = van_layer_pallas(x, params, num_heads=H)
    out = jax.block_until_ready(out)

    ref = van_layer_reference(x, params, num_heads=H)
    assert out.shape == (B, S, D)
    # bf16 matmul operands + approx reciprocal -> slightly looser tolerance than pure f32.
    assert jnp.allclose(out, ref, atol=3e-2, rtol=3e-2), "Pallas output mismatch vs reference"

    print("KERNEL_OK")
</pallas_src>

<mosaic_0001>
module attributes {stable_mosaic.version = 11 : i64} {
  func.func @van_layer_kernel(%arg0: i32, %arg1: i32, %arg2: memref<1x8x32xf32, #tpu.memory_space<vmem>>, %arg3: memref<1x8x32xf32, #tpu.memory_space<vmem>>, %arg4: memref<1x32xf32, #tpu.memory_space<vmem>>, %arg5: memref<1x32xf32, #tpu.memory_space<vmem>>, %arg6: memref<4x32x8xbf16, #tpu.memory_space<vmem>>, %arg7: memref<4x32x8xbf16, #tpu.memory_space<vmem>>, %arg8: memref<4x32x8xbf16, #tpu.memory_space<vmem>>, %arg9: memref<4x8x32xbf16, #tpu.memory_space<vmem>>, %arg10: memref<1x32xf32, #tpu.memory_space<vmem>>, %arg11: memref<1x32xf32, #tpu.memory_space<vmem>>, %arg12: memref<32x128xbf16, #tpu.memory_space<vmem>>, %arg13: memref<1x128xf32, #tpu.memory_space<vmem>>, %arg14: memref<128x32xbf16, #tpu.memory_space<vmem>>, %arg15: memref<1x32xf32, #tpu.memory_space<vmem>>, %arg16: memref<1x8x32xf32, #tpu.memory_space<vmem>>) attributes {dimension_semantics = [#tpu.dimension_semantics<parallel>, #tpu.dimension_semantics<parallel>], iteration_bounds = array<i64: 2, 1>, scalar_prefetch = 0 : i64, scratch_operands = 0 : i64, tpu.core_type = #tpu.core_type<tc>, window_params = [{transform_indices = @transform_0, window_bounds = array<i64: 1, 8, 32>}, {transform_indices = @transform_1, window_bounds = array<i64: 1, 8, 32>}, {pipeline_mode = #tpu.pipeline_mode<synchronous>, transform_indices = @transform_2, window_bounds = array<i64: 1, 32>}, {pipeline_mode = #tpu.pipeline_mode<synchronous>, transform_indices = @transform_3, window_bounds = array<i64: 1, 32>}, {pipeline_mode = #tpu.pipeline_mode<synchronous>, transform_indices = @transform_4, window_bounds = array<i64: 4, 32, 8>}, {pipeline_mode = #tpu.pipeline_mode<synchronous>, transform_indices = @transform_5, window_bounds = array<i64: 4, 32, 8>}, {pipeline_mode = #tpu.pipeline_mode<synchronous>, transform_indices = @transform_6, window_bounds = array<i64: 4, 32, 8>}, {pipeline_mode = #tpu.pipeline_mode<synchronous>, transform_indices = @transform_7, window_bounds = array<i64: 4, 8, 32>}, {pipeline_mode = #tpu.pipeline_mode<synchronous>, transform_indices = @transform_8, window_bounds = array<i64: 1, 32>}, {pipeline_mode = #tpu.pipeline_mode<synchronous>, transform_indices = @transform_9, window_bounds = array<i64: 1, 32>}, {pipeline_mode = #tpu.pipeline_mode<synchronous>, transform_indices = @transform_10, window_bounds = array<i64: 32, 128>}, {pipeline_mode = #tpu.pipeline_mode<synchronous>, transform_indices = @transform_11, window_bounds = array<i64: 1, 128>}, {pipeline_mode = #tpu.pipeline_mode<synchronous>, transform_indices = @transform_12, window_bounds = array<i64: 128, 32>}, {pipeline_mode = #tpu.pipeline_mode<synchronous>, transform_indices = @transform_13, window_bounds = array<i64: 1, 32>}, {transform_indices = @transform_14, window_bounds = array<i64: 1, 8, 32>}]} {
    %c0 = arith.constant 0 : index
    %c0_0 = arith.constant 0 : index
    %c0_1 = arith.constant 0 : index
    %0 = vector.load %arg2[%c0, %c0_0, %c0_1] : memref<1x8x32xf32, #tpu.memory_space<vmem>>, vector<1x8x32xf32>
    %1 = vector.shape_cast %0 : vector<1x8x32xf32> to vector<8x32xf32>
    %c0_2 = arith.constant 0 : index
    %c0_3 = arith.constant 0 : index
    %c0_4 = arith.constant 0 : index
    %2 = vector.load %arg3[%c0_2, %c0_3, %c0_4] : memref<1x8x32xf32, #tpu.memory_space<vmem>>, vector<1x8x32xf32>
    %3 = vector.shape_cast %2 : vector<1x8x32xf32> to vector<8x32xf32>
    %c0_5 = arith.constant 0 : index
    %c0_6 = arith.constant 0 : index
    %4 = vector.load %arg4[%c0_5, %c0_6] : memref<1x32xf32, #tpu.memory_space<vmem>>, vector<1x32xf32>
    %5 = vector.shape_cast %4 : vector<1x32xf32> to vector<32xf32>
    %c0_7 = arith.constant 0 : index
    %c0_8 = arith.constant 0 : index
    %6 = vector.load %arg5[%c0_7, %c0_8] : memref<1x32xf32, #tpu.memory_space<vmem>>, vector<1x32xf32>
    %7 = vector.shape_cast %6 : vector<1x32xf32> to vector<32xf32>
    %cst = arith.constant dense<0.000000e+00> : vector<8xf32>
    %8 = vector.multi_reduction <add>, %1, %cst [1] : vector<8x32xf32> to vector<8xf32>
    %9 = vector.shape_cast %8 : vector<8xf32> to vector<8x1xf32>
    %cst_9 = arith.constant 3.200000e+01 : f32
    %10 = vector.broadcast %cst_9 : f32 to vector<8x1xf32>
    %11 = arith.divf %9, %10 : vector<8x1xf32>
    %12 = vector.broadcast %11 : vector<8x1xf32> to vector<8x32xf32>
    %13 = arith.subf %1, %12 : vector<8x32xf32>
    %14 = arith.mulf %13, %13 : vector<8x32xf32>
    %cst_10 = arith.constant dense<0.000000e+00> : vector<8xf32>
    %15 = vector.multi_reduction <add>, %14, %cst_10 [1] : vector<8x32xf32> to vector<8xf32>
    %16 = vector.shape_cast %15 : vector<8xf32> to vector<8x1xf32>
    %cst_11 = arith.constant 3.200000e+01 : f32
    %17 = vector.broadcast %cst_11 : f32 to vector<8x1xf32>
    %18 = arith.divf %16, %17 : vector<8x1xf32>
    %cst_12 = arith.constant 9.99999974E-6 : f32
    %19 = vector.broadcast %cst_12 : f32 to vector<8x1xf32>
    %20 = arith.addf %18, %19 : vector<8x1xf32>
    %21 = math.rsqrt %20 : vector<8x1xf32>
    %22 = vector.broadcast %21 : vector<8x1xf32> to vector<8x32xf32>
    %23 = arith.mulf %13, %22 : vector<8x32xf32>
    %24 = vector.shape_cast %5 : vector<32xf32> to vector<1x32xf32>
    %25 = vector.broadcast %24 : vector<1x32xf32> to vector<8x32xf32>
    %26 = arith.mulf %23, %25 : vector<8x32xf32>
    %27 = vector.shape_cast %7 : vector<32xf32> to vector<1x32xf32>
    %28 = vector.broadcast %27 : vector<1x32xf32> to vector<8x32xf32>
    %29 = arith.addf %26, %28 : vector<8x32xf32>
    %30 = arith.truncf %29 : vector<8x32xf32> to vector<8x32xbf16>
    %cst_13 = arith.constant dense<0.000000e+00> : vector<8xf32>
    %31 = vector.multi_reduction <add>, %3, %cst_13 [1] : vector<8x32xf32> to vector<8xf32>
    %32 = vector.shape_cast %31 : vector<8xf32> to vector<8x1xf32>
    %cst_14 = arith.constant 3.200000e+01 : f32
    %33 = vector.broadcast %cst_14 : f32 to vector<8x1xf32>
    %34 = arith.divf %32, %33 : vector<8x1xf32>
    %35 = vector.broadcast %34 : vector<8x1xf32> to vector<8x32xf32>
    %36 = arith.subf %3, %35 : vector<8x32xf32>
    %37 = arith.mulf %36, %36 : vector<8x32xf32>
    %cst_15 = arith.constant dense<0.000000e+00> : vector<8xf32>
    %38 = vector.multi_reduction <add>, %37, %cst_15 [1] : vector<8x32xf32> to vector<8xf32>
    %39 = vector.shape_cast %38 : vector<8xf32> to vector<8x1xf32>
    %cst_16 = arith.constant 3.200000e+01 : f32
    %40 = vector.broadcast %cst_16 : f32 to vector<8x1xf32>
    %41 = arith.divf %39, %40 : vector<8x1xf32>
    %cst_17 = arith.constant 9.99999974E-6 : f32
    %42 = vector.broadcast %cst_17 : f32 to vector<8x1xf32>
    %43 = arith.addf %41, %42 : vector<8x1xf32>
    %44 = math.rsqrt %43 : vector<8x1xf32>
    %45 = vector.broadcast %44 : vector<8x1xf32> to vector<8x32xf32>
    %46 = arith.mulf %36, %45 : vector<8x32xf32>
    %47 = vector.shape_cast %5 : vector<32xf32> to vector<1x32xf32>
    %48 = vector.broadcast %47 : vector<1x32xf32> to vector<8x32xf32>
    %49 = arith.mulf %46, %48 : vector<8x32xf32>
    %50 = vector.shape_cast %7 : vector<32xf32> to vector<1x32xf32>
    %51 = vector.broadcast %50 : vector<1x32xf32> to vector<8x32xf32>
    %52 = arith.addf %49, %51 : vector<8x32xf32>
    %53 = arith.truncf %52 : vector<8x32xf32> to vector<8x32xbf16>
    %cst_18 = arith.constant 0.000000e+00 : f32
    %54 = vector.broadcast %cst_18 : f32 to vector<8x32xf32>
    %c0_19 = arith.constant 0 : index
    %c0_20 = arith.constant 0 : index
    %c0_21 = arith.constant 0 : index
    %55 = vector.load %arg6[%c0_19, %c0_20, %c0_21] : memref<4x32x8xbf16, #tpu.memory_space<vmem>>, vector<1x32x8xbf16>
    %56 = vector.shape_cast %55 : vector<1x32x8xbf16> to vector<32x8xbf16>
    %cst_22 = arith.constant dense<0.000000e+00> : vector<8x8xf32>
    %57 = tpu.matmul %30, %56, %cst_22 {dimension_numbers = #tpu.dot_dimension_numbers<[1], [0], [0], [1], [0, 0, 1, 1], [], []>} : vector<8x32xbf16>, vector<32x8xbf16>, vector<8x8xf32> -> vector<8x8xf32>
    %58 = arith.truncf %57 : vector<8x8xf32> to vector<8x8xbf16>
    %c0_23 = arith.constant 0 : index
    %c0_24 = arith.constant 0 : index
    %c0_25 = arith.constant 0 : index
    %59 = vector.load %arg7[%c0_23, %c0_24, %c0_25] : memref<4x32x8xbf16, #tpu.memory_space<vmem>>, vector<1x32x8xbf16>
    %60 = vector.shape_cast %59 : vector<1x32x8xbf16> to vector<32x8xbf16>
    %cst_26 = arith.constant dense<0.000000e+00> : vector<8x8xf32>
    %61 = tpu.matmul %53, %60, %cst_26 {dimension_numbers = #tpu.dot_dimension_numbers<[1], [0], [0], [1], [0, 0, 1, 1], [], []>} : vector<8x32xbf16>, vector<32x8xbf16>, vector<8x8xf32> -> vector<8x8xf32>
    %62 = arith.truncf %61 : vector<8x8xf32> to vector<8x8xbf16>
    %c0_27 = arith.constant 0 : index
    %c0_28 = arith.constant 0 : index
    %c0_29 = arith.constant 0 : index
    %63 = vector.load %arg8[%c0_27, %c0_28, %c0_29] : memref<4x32x8xbf16, #tpu.memory_space<vmem>>, vector<1x32x8xbf16>
    %64 = vector.shape_cast %63 : vector<1x32x8xbf16> to vector<32x8xbf16>
    %cst_30 = arith.constant dense<0.000000e+00> : vector<8x8xf32>
    %65 = tpu.matmul %53, %64, %cst_30 {dimension_numbers = #tpu.dot_dimension_numbers<[1], [0], [0], [1], [0, 0, 1, 1], [], []>} : vector<8x32xbf16>, vector<32x8xbf16>, vector<8x8xf32> -> vector<8x8xf32>
    %66 = arith.truncf %65 : vector<8x8xf32> to vector<8x8xbf16>
    %cst_31 = arith.constant 0xFF800000 : f32
    %67 = vector.broadcast %cst_31 : f32 to vector<8x1xf32>
    %cst_32 = arith.constant 0.000000e+00 : f32
    %68 = vector.broadcast %cst_32 : f32 to vector<8x1xf32>
    %cst_33 = arith.constant 0.000000e+00 : f32
    %69 = vector.broadcast %cst_33 : f32 to vector<8x8xf32>
    %cst_34 = arith.constant dense<0.000000e+00> : vector<8x8xf32>
    %70 = tpu.matmul %58, %62, %cst_34 {dimension_numbers = #tpu.dot_dimension_numbers<[1], [1], [0], [0], [0, 0, 1, 0], [], []>} : vector<8x8xbf16>, vector<8x8xbf16>, vector<8x8xf32> -> vector<8x8xf32>
    %cst_35 = arith.constant 0.176776692 : f32
    %71 = vector.broadcast %cst_35 : f32 to vector<8x8xf32>
    %72 = arith.mulf %70, %71 : vector<8x8xf32>
    %cst_36 = arith.constant dense<0xFF800000> : vector<8xf32>
    %73 = vector.multi_reduction <maximumf>, %72, %cst_36 [1] : vector<8x8xf32> to vector<8xf32>
    %74 = vector.shape_cast %73 : vector<8xf32> to vector<8x1xf32>
    %75 = arith.maximumf %67, %74 : vector<8x1xf32>
    %76 = arith.subf %67, %75 : vector<8x1xf32>
    %77 = math.exp %76 : vector<8x1xf32>
    %78 = vector.broadcast %75 : vector<8x1xf32> to vector<8x8xf32>
    %79 = arith.subf %72, %78 : vector<8x8xf32>
    %80 = math.exp %79 : vector<8x8xf32>
    %81 = arith.mulf %77, %68 : vector<8x1xf32>
    %cst_37 = arith.constant dense<0.000000e+00> : vector<8xf32>
    %82 = vector.multi_reduction <add>, %80, %cst_37 [1] : vector<8x8xf32> to vector<8xf32>
    %83 = vector.shape_cast %82 : vector<8xf32> to vector<8x1xf32>
    %84 = arith.addf %81, %83 : vector<8x1xf32>
    %85 = vector.broadcast %77 : vector<8x1xf32> to vector<8x8xf32>
    %86 = arith.mulf %85, %69 : vector<8x8xf32>
    %87 = arith.truncf %80 : vector<8x8xf32> to vector<8x8xbf16>
    %cst_38 = arith.constant dense<0.000000e+00> : vector<8x8xf32>
    %88 = tpu.matmul %87, %66, %cst_38 {dimension_numbers = #tpu.dot_dimension_numbers<[1], [0], [0], [1], [0, 0, 1, 1], [], []>} : vector<8x8xbf16>, vector<8x8xbf16>, vector<8x8xf32> -> vector<8x8xf32>
    %89 = arith.addf %86, %88 : vector<8x8xf32>
    %90 = tpu.reciprocal %84 {approx = true} : vector<8x1xf32> -> vector<8x1xf32>
    %91 = vector.broadcast %90 : vector<8x1xf32> to vector<8x8xf32>
    %92 = arith.mulf %89, %91 : vector<8x8xf32>
    %93 = arith.truncf %92 : vector<8x8xf32> to vector<8x8xbf16>
    %c0_39 = arith.constant 0 : index
    %c0_40 = arith.constant 0 : index
    %c0_41 = arith.constant 0 : index
    %94 = vector.load %arg9[%c0_39, %c0_40, %c0_41] : memref<4x8x32xbf16, #tpu.memory_space<vmem>>, vector<1x8x32xbf16>
    %95 = vector.shape_cast %94 : vector<1x8x32xbf16> to vector<8x32xbf16>
    %cst_42 = arith.constant dense<0.000000e+00> : vector<8x32xf32>
    %96 = tpu.matmul %93, %95, %cst_42 {dimension_numbers = #tpu.dot_dimension_numbers<[1], [0], [0], [1], [0, 0, 1, 1], [], []>} : vector<8x8xbf16>, vector<8x32xbf16>, vector<8x32xf32> -> vector<8x32xf32>
    %97 = arith.addf %54, %96 : vector<8x32xf32>
    %c1 = arith.constant 1 : index
    %c0_43 = arith.constant 0 : index
    %c0_44 = arith.constant 0 : index
    %98 = vector.load %arg6[%c1, %c0_43, %c0_44] : memref<4x32x8xbf16, #tpu.memory_space<vmem>>, vector<1x32x8xbf16>
    %99 = vector.shape_cast %98 : vector<1x32x8xbf16> to vector<32x8xbf16>
    %cst_45 = arith.constant dense<0.000000e+00> : vector<8x8xf32>
    %100 = tpu.matmul %30, %99, %cst_45 {dimension_numbers = #tpu.dot_dimension_numbers<[1], [0], [0], [1], [0, 0, 1, 1], [], []>} : vector<8x32xbf16>, vector<32x8xbf16>, vector<8x8xf32> -> vector<8x8xf32>
    %101 = arith.truncf %100 : vector<8x8xf32> to vector<8x8xbf16>
    %c1_46 = arith.constant 1 : index
    %c0_47 = arith.constant 0 : index
    %c0_48 = arith.constant 0 : index
    %102 = vector.load %arg7[%c1_46, %c0_47, %c0_48] : memref<4x32x8xbf16, #tpu.memory_space<vmem>>, vector<1x32x8xbf16>
    %103 = vector.shape_cast %102 : vector<1x32x8xbf16> to vector<32x8xbf16>
    %cst_49 = arith.constant dense<0.000000e+00> : vector<8x8xf32>
    %104 = tpu.matmul %53, %103, %cst_49 {dimension_numbers = #tpu.dot_dimension_numbers<[1], [0], [0], [1], [0, 0, 1, 1], [], []>} : vector<8x32xbf16>, vector<32x8xbf16>, vector<8x8xf32> -> vector<8x8xf32>
    %105 = arith.truncf %104 : vector<8x8xf32> to vector<8x8xbf16>
    %c1_50 = arith.constant 1 : index
    %c0_51 = arith.constant 0 : index
    %c0_52 = arith.constant 0 : index
    %106 = vector.load %arg8[%c1_50, %c0_51, %c0_52] : memref<4x32x8xbf16, #tpu.memory_space<vmem>>, vector<1x32x8xbf16>
    %107 = vector.shape_cast %106 : vector<1x32x8xbf16> to vector<32x8xbf16>
    %cst_53 = arith.constant dense<0.000000e+00> : vector<8x8xf32>
    %108 = tpu.matmul %53, %107, %cst_53 {dimension_numbers = #tpu.dot_dimension_numbers<[1], [0], [0], [1], [0, 0, 1, 1], [], []>} : vector<8x32xbf16>, vector<32x8xbf16>, vector<8x8xf32> -> vector<8x8xf32>
    %109 = arith.truncf %108 : vector<8x8xf32> to vector<8x8xbf16>
    %cst_54 = arith.constant 0xFF800000 : f32
    %110 = vector.broadcast %cst_54 : f32 to vector<8x1xf32>
    %cst_55 = arith.constant 0.000000e+00 : f32
    %111 = vector.broadcast %cst_55 : f32 to vector<8x1xf32>
    %cst_56 = arith.constant 0.000000e+00 : f32
    %112 = vector.broadcast %cst_56 : f32 to vector<8x8xf32>
    %cst_57 = arith.constant dense<0.000000e+00> : vector<8x8xf32>
    %113 = tpu.matmul %101, %105, %cst_57 {dimension_numbers = #tpu.dot_dimension_numbers<[1], [1], [0], [0], [0, 0, 1, 0], [], []>} : vector<8x8xbf16>, vector<8x8xbf16>, vector<8x8xf32> -> vector<8x8xf32>
    %cst_58 = arith.constant 0.176776692 : f32
    %114 = vector.broadcast %cst_58 : f32 to vector<8x8xf32>
    %115 = arith.mulf %113, %114 : vector<8x8xf32>
    %cst_59 = arith.constant dense<0xFF800000> : vector<8xf32>
    %116 = vector.multi_reduction <maximumf>, %115, %cst_59 [1] : vector<8x8xf32> to vector<8xf32>
    %117 = vector.shape_cast %116 : vector<8xf32> to vector<8x1xf32>
    %118 = arith.maximumf %110, %117 : vector<8x1xf32>
    %119 = arith.subf %110, %118 : vector<8x1xf32>
    %120 = math.exp %119 : vector<8x1xf32>
    %121 = vector.broadcast %118 : vector<8x1xf32> to vector<8x8xf32>
    %122 = arith.subf %115, %121 : vector<8x8xf32>
    %123 = math.exp %122 : vector<8x8xf32>
    %124 = arith.mulf %120, %111 : vector<8x1xf32>
    %cst_60 = arith.constant dense<0.000000e+00> : vector<8xf32>
    %125 = vector.multi_reduction <add>, %123, %cst_60 [1] : vector<8x8xf32> to vector<8xf32>
    %126 = vector.shape_cast %125 : vector<8xf32> to vector<8x1xf32>
    %127 = arith.addf %124, %126 : vector<8x1xf32>
    %128 = vector.broadcast %120 : vector<8x1xf32> to vector<8x8xf32>
    %129 = arith.mulf %128, %112 : vector<8x8xf32>
    %130 = arith.truncf %123 : vector<8x8xf32> to vector<8x8xbf16>
    %cst_61 = arith.constant dense<0.000000e+00> : vector<8x8xf32>
    %131 = tpu.matmul %130, %109, %cst_61 {dimension_numbers = #tpu.dot_dimension_numbers<[1], [0], [0], [1], [0, 0, 1, 1], [], []>} : vector<8x8xbf16>, vector<8x8xbf16>, vector<8x8xf32> -> vector<8x8xf32>
    %132 = arith.addf %129, %131 : vector<8x8xf32>
    %133 = tpu.reciprocal %127 {approx = true} : vector<8x1xf32> -> vector<8x1xf32>
    %134 = vector.broadcast %133 : vector<8x1xf32> to vector<8x8xf32>
    %135 = arith.mulf %132, %134 : vector<8x8xf32>
    %136 = arith.truncf %135 : vector<8x8xf32> to vector<8x8xbf16>
    %c1_62 = arith.constant 1 : index
    %c0_63 = arith.constant 0 : index
    %c0_64 = arith.constant 0 : index
    %137 = vector.load %arg9[%c1_62, %c0_63, %c0_64] : memref<4x8x32xbf16, #tpu.memory_space<vmem>>, vector<1x8x32xbf16>
    %138 = vector.shape_cast %137 : vector<1x8x32xbf16> to vector<8x32xbf16>
    %cst_65 = arith.constant dense<0.000000e+00> : vector<8x32xf32>
    %139 = tpu.matmul %136, %138, %cst_65 {dimension_numbers = #tpu.dot_dimension_numbers<[1], [0], [0], [1], [0, 0, 1, 1], [], []>} : vector<8x8xbf16>, vector<8x32xbf16>, vector<8x32xf32> -> vector<8x32xf32>
    %140 = arith.addf %97, %139 : vector<8x32xf32>
    %c2 = arith.constant 2 : index
    %c0_66 = arith.constant 0 : index
    %c0_67 = arith.constant 0 : index
    %141 = vector.load %arg6[%c2, %c0_66, %c0_67] : memref<4x32x8xbf16, #tpu.memory_space<vmem>>, vector<1x32x8xbf16>
    %142 = vector.shape_cast %141 : vector<1x32x8xbf16> to vector<32x8xbf16>
    %cst_68 = arith.constant dense<0.000000e+00> : vector<8x8xf32>
    %143 = tpu.matmul %30, %142, %cst_68 {dimension_numbers = #tpu.dot_dimension_numbers<[1], [0], [0], [1], [0, 0, 1, 1], [], []>} : vector<8x32xbf16>, vector<32x8xbf16>, vector<8x8xf32> -> vector<8x8xf32>
    %144 = arith.truncf %143 : vector<8x8xf32> to vector<8x8xbf16>
    %c2_69 = arith.constant 2 : index
    %c0_70 = arith.constant 0 : index
    %c0_71 = arith.constant 0 : index
    %145 = vector.load %arg7[%c2_69, %c0_70, %c0_71] : memref<4x32x8xbf16, #tpu.memory_space<vmem>>, vector<1x32x8xbf16>
    %146 = vector.shape_cast %145 : vector<1x32x8xbf16> to vector<32x8xbf16>
    %cst_72 = arith.constant dense<0.000000e+00> : vector<8x8xf32>
    %147 = tpu.matmul %53, %146, %cst_72 {dimension_numbers = #tpu.dot_dimension_numbers<[1], [0], [0], [1], [0, 0, 1, 1], [], []>} : vector<8x32xbf16>, vector<32x8xbf16>, vector<8x8xf32> -> vector<8x8xf32>
    %148 = arith.truncf %147 : vector<8x8xf32> to vector<8x8xbf16>
    %c2_73 = arith.constant 2 : index
    %c0_74 = arith.constant 0 : index
    %c0_75 = arith.constant 0 : index
    %149 = vector.load %arg8[%c2_73, %c0_74, %c0_75] : memref<4x32x8xbf16, #tpu.memory_space<vmem>>, vector<1x32x8xbf16>
    %150 = vector.shape_cast %149 : vector<1x32x8xbf16> to vector<32x8xbf16>
    %cst_76 = arith.constant dense<0.000000e+00> : vector<8x8xf32>
    %151 = tpu.matmul %53, %150, %cst_76 {dimension_numbers = #tpu.dot_dimension_numbers<[1], [0], [0], [1], [0, 0, 1, 1], [], []>} : vector<8x32xbf16>, vector<32x8xbf16>, vector<8x8xf32> -> vector<8x8xf32>
    %152 = arith.truncf %151 : vector<8x8xf32> to vector<8x8xbf16>
    %cst_77 = arith.constant 0xFF800000 : f32
    %153 = vector.broadcast %cst_77 : f32 to vector<8x1xf32>
    %cst_78 = arith.constant 0.000000e+00 : f32
    %154 = vector.broadcast %cst_78 : f32 to vector<8x1xf32>
    %cst_79 = arith.constant 0.000000e+00 : f32
    %155 = vector.broadcast %cst_79 : f32 to vector<8x8xf32>
    %cst_80 = arith.constant dense<0.000000e+00> : vector<8x8xf32>
    %156 = tpu.matmul %144, %148, %cst_80 {dimension_numbers = #tpu.dot_dimension_numbers<[1], [1], [0], [0], [0, 0, 1, 0], [], []>} : vector<8x8xbf16>, vector<8x8xbf16>, vector<8x8xf32> -> vector<8x8xf32>
    %cst_81 = arith.constant 0.176776692 : f32
    %157 = vector.broadcast %cst_81 : f32 to vector<8x8xf32>
    %158 = arith.mulf %156, %157 : vector<8x8xf32>
    %cst_82 = arith.constant dense<0xFF800000> : vector<8xf32>
    %159 = vector.multi_reduction <maximumf>, %158, %cst_82 [1] : vector<8x8xf32> to vector<8xf32>
    %160 = vector.shape_cast %159 : vector<8xf32> to vector<8x1xf32>
    %161 = arith.maximumf %153, %160 : vector<8x1xf32>
    %162 = arith.subf %153, %161 : vector<8x1xf32>
    %163 = math.exp %162 : vector<8x1xf32>
    %164 = vector.broadcast %161 : vector<8x1xf32> to vector<8x8xf32>
    %165 = arith.subf %158, %164 : vector<8x8xf32>
    %166 = math.exp %165 : vector<8x8xf32>
    %167 = arith.mulf %163, %154 : vector<8x1xf32>
    %cst_83 = arith.constant dense<0.000000e+00> : vector<8xf32>
    %168 = vector.multi_reduction <add>, %166, %cst_83 [1] : vector<8x8xf32> to vector<8xf32>
    %169 = vector.shape_cast %168 : vector<8xf32> to vector<8x1xf32>
    %170 = arith.addf %167, %169 : vector<8x1xf32>
    %171 = vector.broadcast %163 : vector<8x1xf32> to vector<8x8xf32>
    %172 = arith.mulf %171, %155 : vector<8x8xf32>
    %173 = arith.truncf %166 : vector<8x8xf32> to vector<8x8xbf16>
    %cst_84 = arith.constant dense<0.000000e+00> : vector<8x8xf32>
    %174 = tpu.matmul %173, %152, %cst_84 {dimension_numbers = #tpu.dot_dimension_numbers<[1], [0], [0], [1], [0, 0, 1, 1], [], []>} : vector<8x8xbf16>, vector<8x8xbf16>, vector<8x8xf32> -> vector<8x8xf32>
    %175 = arith.addf %172, %174 : vector<8x8xf32>
    %176 = tpu.reciprocal %170 {approx = true} : vector<8x1xf32> -> vector<8x1xf32>
    %177 = vector.broadcast %176 : vector<8x1xf32> to vector<8x8xf32>
    %178 = arith.mulf %175, %177 : vector<8x8xf32>
    %179 = arith.truncf %178 : vector<8x8xf32> to vector<8x8xbf16>
    %c2_85 = arith.constant 2 : index
    %c0_86 = arith.constant 0 : index
    %c0_87 = arith.constant 0 : index
    %180 = vector.load %arg9[%c2_85, %c0_86, %c0_87] : memref<4x8x32xbf16, #tpu.memory_space<vmem>>, vector<1x8x32xbf16>
    %181 = vector.shape_cast %180 : vector<1x8x32xbf16> to vector<8x32xbf16>
    %cst_88 = arith.constant dense<0.000000e+00> : vector<8x32xf32>
    %182 = tpu.matmul %179, %181, %cst_88 {dimension_numbers = #tpu.dot_dimension_numbers<[1], [0], [0], [1], [0, 0, 1, 1], [], []>} : vector<8x8xbf16>, vector<8x32xbf16>, vector<8x32xf32> -> vector<8x32xf32>
    %183 = arith.addf %140, %182 : vector<8x32xf32>
    %c3 = arith.constant 3 : index
    %c0_89 = arith.constant 0 : index
    %c0_90 = arith.constant 0 : index
    %184 = vector.load %arg6[%c3, %c0_89, %c0_90] : memref<4x32x8xbf16, #tpu.memory_space<vmem>>, vector<1x32x8xbf16>
    %185 = vector.shape_cast %184 : vector<1x32x8xbf16> to vector<32x8xbf16>
    %cst_91 = arith.constant dense<0.000000e+00> : vector<8x8xf32>
    %186 = tpu.matmul %30, %185, %cst_91 {dimension_numbers = #tpu.dot_dimension_numbers<[1], [0], [0], [1], [0, 0, 1, 1], [], []>} : vector<8x32xbf16>, vector<32x8xbf16>, vector<8x8xf32> -> vector<8x8xf32>
    %187 = arith.truncf %186 : vector<8x8xf32> to vector<8x8xbf16>
    %c3_92 = arith.constant 3 : index
    %c0_93 = arith.constant 0 : index
    %c0_94 = arith.constant 0 : index
    %188 = vector.load %arg7[%c3_92, %c0_93, %c0_94] : memref<4x32x8xbf16, #tpu.memory_space<vmem>>, vector<1x32x8xbf16>
    %189 = vector.shape_cast %188 : vector<1x32x8xbf16> to vector<32x8xbf16>
    %cst_95 = arith.constant dense<0.000000e+00> : vector<8x8xf32>
    %190 = tpu.matmul %53, %189, %cst_95 {dimension_numbers = #tpu.dot_dimension_numbers<[1], [0], [0], [1], [0, 0, 1, 1], [], []>} : vector<8x32xbf16>, vector<32x8xbf16>, vector<8x8xf32> -> vector<8x8xf32>
    %191 = arith.truncf %190 : vector<8x8xf32> to vector<8x8xbf16>
    %c3_96 = arith.constant 3 : index
    %c0_97 = arith.constant 0 : index
    %c0_98 = arith.constant 0 : index
    %192 = vector.load %arg8[%c3_96, %c0_97, %c0_98] : memref<4x32x8xbf16, #tpu.memory_space<vmem>>, vector<1x32x8xbf16>
    %193 = vector.shape_cast %192 : vector<1x32x8xbf16> to vector<32x8xbf16>
    %cst_99 = arith.constant dense<0.000000e+00> : vector<8x8xf32>
    %194 = tpu.matmul %53, %193, %cst_99 {dimension_numbers = #tpu.dot_dimension_numbers<[1], [0], [0], [1], [0, 0, 1, 1], [], []>} : vector<8x32xbf16>, vector<32x8xbf16>, vector<8x8xf32> -> vector<8x8xf32>
    %195 = arith.truncf %194 : vector<8x8xf32> to vector<8x8xbf16>
    %cst_100 = arith.constant 0xFF800000 : f32
    %196 = vector.broadcast %cst_100 : f32 to vector<8x1xf32>
    %cst_101 = arith.constant 0.000000e+00 : f32
    %197 = vector.broadcast %cst_101 : f32 to vector<8x1xf32>
    %cst_102 = arith.constant 0.000000e+00 : f32
    %198 = vector.broadcast %cst_102 : f32 to vector<8x8xf32>
    %cst_103 = arith.constant dense<0.000000e+00> : vector<8x8xf32>
    %199 = tpu.matmul %187, %191, %cst_103 {dimension_numbers = #tpu.dot_dimension_numbers<[1], [1], [0], [0], [0, 0, 1, 0], [], []>} : vector<8x8xbf16>, vector<8x8xbf16>, vector<8x8xf32> -> vector<8x8xf32>
    %cst_104 = arith.constant 0.176776692 : f32
    %200 = vector.broadcast %cst_104 : f32 to vector<8x8xf32>
    %201 = arith.mulf %199, %200 : vector<8x8xf32>
    %cst_105 = arith.constant dense<0xFF800000> : vector<8xf32>
    %202 = vector.multi_reduction <maximumf>, %201, %cst_105 [1] : vector<8x8xf32> to vector<8xf32>
    %203 = vector.shape_cast %202 : vector<8xf32> to vector<8x1xf32>
    %204 = arith.maximumf %196, %203 : vector<8x1xf32>
    %205 = arith.subf %196, %204 : vector<8x1xf32>
    %206 = math.exp %205 : vector<8x1xf32>
    %207 = vector.broadcast %204 : vector<8x1xf32> to vector<8x8xf32>
    %208 = arith.subf %201, %207 : vector<8x8xf32>
    %209 = math.exp %208 : vector<8x8xf32>
    %210 = arith.mulf %206, %197 : vector<8x1xf32>
    %cst_106 = arith.constant dense<0.000000e+00> : vector<8xf32>
    %211 = vector.multi_reduction <add>, %209, %cst_106 [1] : vector<8x8xf32> to vector<8xf32>
    %212 = vector.shape_cast %211 : vector<8xf32> to vector<8x1xf32>
    %213 = arith.addf %210, %212 : vector<8x1xf32>
    %214 = vector.broadcast %206 : vector<8x1xf32> to vector<8x8xf32>
    %215 = arith.mulf %214, %198 : vector<8x8xf32>
    %216 = arith.truncf %209 : vector<8x8xf32> to vector<8x8xbf16>
    %cst_107 = arith.constant dense<0.000000e+00> : vector<8x8xf32>
    %217 = tpu.matmul %216, %195, %cst_107 {dimension_numbers = #tpu.dot_dimension_numbers<[1], [0], [0], [1], [0, 0, 1, 1], [], []>} : vector<8x8xbf16>, vector<8x8xbf16>, vector<8x8xf32> -> vector<8x8xf32>
    %218 = arith.addf %215, %217 : vector<8x8xf32>
    %219 = tpu.reciprocal %213 {approx = true} : vector<8x1xf32> -> vector<8x1xf32>
    %220 = vector.broadcast %219 : vector<8x1xf32> to vector<8x8xf32>
    %221 = arith.mulf %218, %220 : vector<8x8xf32>
    %222 = arith.truncf %221 : vector<8x8xf32> to vector<8x8xbf16>
    %c3_108 = arith.constant 3 : index
    %c0_109 = arith.constant 0 : index
    %c0_110 = arith.constant 0 : index
    %223 = vector.load %arg9[%c3_108, %c0_109, %c0_110] : memref<4x8x32xbf16, #tpu.memory_space<vmem>>, vector<1x8x32xbf16>
    %224 = vector.shape_cast %223 : vector<1x8x32xbf16> to vector<8x32xbf16>
    %cst_111 = arith.constant dense<0.000000e+00> : vector<8x32xf32>
    %225 = tpu.matmul %222, %224, %cst_111 {dimension_numbers = #tpu.dot_dimension_numbers<[1], [0], [0], [1], [0, 0, 1, 1], [], []>} : vector<8x8xbf16>, vector<8x32xbf16>, vector<8x32xf32> -> vector<8x32xf32>
    %226 = arith.addf %183, %225 : vector<8x32xf32>
    %227 = arith.addf %1, %226 : vector<8x32xf32>
    %c0_112 = arith.constant 0 : index
    %c0_113 = arith.constant 0 : index
    %228 = vector.load %arg10[%c0_112, %c0_113] : memref<1x32xf32, #tpu.memory_space<vmem>>, vector<1x32xf32>
    %229 = vector.shape_cast %228 : vector<1x32xf32> to vector<32xf32>
    %c0_114 = arith.constant 0 : index
    %c0_115 = arith.constant 0 : index
    %230 = vector.load %arg11[%c0_114, %c0_115] : memref<1x32xf32, #tpu.memory_space<vmem>>, vector<1x32xf32>
    %231 = vector.shape_cast %230 : vector<1x32xf32> to vector<32xf32>
    %cst_116 = arith.constant dense<0.000000e+00> : vector<8xf32>
    %232 = vector.multi_reduction <add>, %227, %cst_116 [1] : vector<8x32xf32> to vector<8xf32>
    %233 = vector.shape_cast %232 : vector<8xf32> to vector<8x1xf32>
    %cst_117 = arith.constant 3.200000e+01 : f32
    %234 = vector.broadcast %cst_117 : f32 to vector<8x1xf32>
    %235 = arith.divf %233, %234 : vector<8x1xf32>
    %236 = vector.broadcast %235 : vector<8x1xf32> to vector<8x32xf32>
    %237 = arith.subf %227, %236 : vector<8x32xf32>
    %238 = arith.mulf %237, %237 : vector<8x32xf32>
    %cst_118 = arith.constant dense<0.000000e+00> : vector<8xf32>
    %239 = vector.multi_reduction <add>, %238, %cst_118 [1] : vector<8x32xf32> to vector<8xf32>
    %240 = vector.shape_cast %239 : vector<8xf32> to vector<8x1xf32>
    %cst_119 = arith.constant 3.200000e+01 : f32
    %241 = vector.broadcast %cst_119 : f32 to vector<8x1xf32>
    %242 = arith.divf %240, %241 : vector<8x1xf32>
    %cst_120 = arith.constant 9.99999974E-6 : f32
    %243 = vector.broadcast %cst_120 : f32 to vector<8x1xf32>
    %244 = arith.addf %242, %243 : vector<8x1xf32>
    %245 = math.rsqrt %244 : vector<8x1xf32>
    %246 = vector.broadcast %245 : vector<8x1xf32> to vector<8x32xf32>
    %247 = arith.mulf %237, %246 : vector<8x32xf32>
    %248 = vector.shape_cast %229 : vector<32xf32> to vector<1x32xf32>
    %249 = vector.broadcast %248 : vector<1x32xf32> to vector<8x32xf32>
    %250 = arith.mulf %247, %249 : vector<8x32xf32>
    %251 = vector.shape_cast %231 : vector<32xf32> to vector<1x32xf32>
    %252 = vector.broadcast %251 : vector<1x32xf32> to vector<8x32xf32>
    %253 = arith.addf %250, %252 : vector<8x32xf32>
    %254 = arith.truncf %253 : vector<8x32xf32> to vector<8x32xbf16>
    %c0_121 = arith.constant 0 : index
    %c0_122 = arith.constant 0 : index
    %255 = vector.load %arg12[%c0_121, %c0_122] : memref<32x128xbf16, #tpu.memory_space<vmem>>, vector<32x128xbf16>
    %cst_123 = arith.constant dense<0.000000e+00> : vector<8x128xf32>
    %256 = tpu.matmul %254, %255, %cst_123 {dimension_numbers = #tpu.dot_dimension_numbers<[1], [0], [0], [1], [0, 0, 1, 1], [], []>} : vector<8x32xbf16>, vector<32x128xbf16>, vector<8x128xf32> -> vector<8x128xf32>
    %c0_124 = arith.constant 0 : index
    %c0_125 = arith.constant 0 : index
    %257 = vector.load %arg13[%c0_124, %c0_125] : memref<1x128xf32, #tpu.memory_space<vmem>>, vector<1x128xf32>
    %258 = vector.shape_cast %257 : vector<1x128xf32> to vector<128xf32>
    %259 = vector.shape_cast %258 : vector<128xf32> to vector<1x128xf32>
    %260 = vector.broadcast %259 : vector<1x128xf32> to vector<8x128xf32>
    %261 = arith.addf %256, %260 : vector<8x128xf32>
    %cst_126 = arith.constant 0.000000e+00 : f32
    %262 = vector.broadcast %cst_126 : f32 to vector<8x128xf32>
    %263 = arith.maximumf %261, %262 : vector<8x128xf32>
    %264 = arith.truncf %263 : vector<8x128xf32> to vector<8x128xbf16>
    %c0_127 = arith.constant 0 : index
    %c0_128 = arith.constant 0 : index
    %265 = vector.load %arg14[%c0_127, %c0_128] : memref<128x32xbf16, #tpu.memory_space<vmem>>, vector<128x32xbf16>
    %cst_129 = arith.constant dense<0.000000e+00> : vector<8x32xf32>
    %266 = tpu.matmul %264, %265, %cst_129 {dimension_numbers = #tpu.dot_dimension_numbers<[1], [0], [0], [1], [0, 0, 1, 1], [], []>} : vector<8x128xbf16>, vector<128x32xbf16>, vector<8x32xf32> -> vector<8x32xf32>
    %c0_130 = arith.constant 0 : index
    %c0_131 = arith.constant 0 : index
    %267 = vector.load %arg15[%c0_130, %c0_131] : memref<1x32xf32, #tpu.memory_space<vmem>>, vector<1x32xf32>
    %268 = vector.shape_cast %267 : vector<1x32xf32> to vector<32xf32>
    %269 = vector.shape_cast %268 : vector<32xf32> to vector<1x32xf32>
    %270 = vector.broadcast %269 : vector<1x32xf32> to vector<8x32xf32>
    %271 = arith.addf %266, %270 : vector<8x32xf32>
    %272 = arith.addf %227, %271 : vector<8x32xf32>
    %c0_132 = arith.constant 0 : index
    %c0_133 = arith.constant 0 : index
    %c0_134 = arith.constant 0 : index
    %273 = vector.load %arg16[%c0_132, %c0_133, %c0_134] : memref<1x8x32xf32, #tpu.memory_space<vmem>>, vector<1x8x32xf32>
    %274 = vector.shape_cast %273 : vector<1x8x32xf32> to vector<8x32xf32>
    %275 = vector.shape_cast %272 : vector<8x32xf32> to vector<1x8x32xf32>
    tpu.vector_store %arg16[%c0_132, %c0_133, %c0_134], %275 {strides = array<i32>} : memref<1x8x32xf32, #tpu.memory_space<vmem>>, vector<1x8x32xf32>,
    return
  }
  func.func @transform_0(%arg0: i32, %arg1: i32) -> (i32, i32, i32) {
    %c0_i32 = arith.constant 0 : i32
    %c0_i32_0 = arith.constant 0 : i32
    return %arg0, %arg1, %c0_i32 : i32, i32, i32
  }
  func.func @transform_1(%arg0: i32, %arg1: i32) -> (i32, i32, i32) {
    %c0_i32 = arith.constant 0 : i32
    %c0_i32_0 = arith.constant 0 : i32
    %c0_i32_1 = arith.constant 0 : i32
    return %arg0, %c0_i32, %c0_i32_0 : i32, i32, i32
  }
  func.func @transform_2(%arg0: i32, %arg1: i32) -> (i32, i32) {
    %c0_i32 = arith.constant 0 : i32
    %c0_i32_0 = arith.constant 0 : i32
    %c0_i32_1 = arith.constant 0 : i32
    return %c0_i32, %c0_i32_0 : i32, i32
  }
  func.func @transform_3(%arg0: i32, %arg1: i32) -> (i32, i32) {
    %c0_i32 = arith.constant 0 : i32
    %c0_i32_0 = arith.constant 0 : i32
    %c0_i32_1 = arith.constant 0 : i32
    return %c0_i32, %c0_i32_0 : i32, i32
  }
  func.func @transform_4(%arg0: i32, %arg1: i32) -> (i32, i32, i32) {
    %c0_i32 = arith.constant 0 : i32
    %c0_i32_0 = arith.constant 0 : i32
    %c0_i32_1 = arith.constant 0 : i32
    %c0_i32_2 = arith.constant 0 : i32
    return %c0_i32, %c0_i32_0, %c0_i32_1 : i32, i32, i32
  }
  func.func @transform_5(%arg0: i32, %arg1: i32) -> (i32, i32, i32) {
    %c0_i32 = arith.constant 0 : i32
    %c0_i32_0 = arith.constant 0 : i32
    %c0_i32_1 = arith.constant 0 : i32
    %c0_i32_2 = arith.constant 0 : i32
    return %c0_i32, %c0_i32_0, %c0_i32_1 : i32, i32, i32
  }
  func.func @transform_6(%arg0: i32, %arg1: i32) -> (i32, i32, i32) {
    %c0_i32 = arith.constant 0 : i32
    %c0_i32_0 = arith.constant 0 : i32
    %c0_i32_1 = arith.constant 0 : i32
    %c0_i32_2 = arith.constant 0 : i32
    return %c0_i32, %c0_i32_0, %c0_i32_1 : i32, i32, i32
  }
  func.func @transform_7(%arg0: i32, %arg1: i32) -> (i32, i32, i32) {
    %c0_i32 = arith.constant 0 : i32
    %c0_i32_0 = arith.constant 0 : i32
    %c0_i32_1 = arith.constant 0 : i32
    %c0_i32_2 = arith.constant 0 : i32
    return %c0_i32, %c0_i32_0, %c0_i32_1 : i32, i32, i32
  }
  func.func @transform_8(%arg0: i32, %arg1: i32) -> (i32, i32) {
    %c0_i32 = arith.constant 0 : i32
    %c0_i32_0 = arith.constant 0 : i32
    %c0_i32_1 = arith.constant 0 : i32
    return %c0_i32, %c0_i32_0 : i32, i32
  }
  func.func @transform_9(%arg0: i32, %arg1: i32) -> (i32, i32) {
    %c0_i32 = arith.constant 0 : i32
    %c0_i32_0 = arith.constant 0 : i32
    %c0_i32_1 = arith.constant 0 : i32
    return %c0_i32, %c0_i32_0 : i32, i32
  }
  func.func @transform_10(%arg0: i32, %arg1: i32) -> (i32, i32) {
    %c0_i32 = arith.constant 0 : i32
    %c0_i32_0 = arith.constant 0 : i32
    %c0_i32_1 = arith.constant 0 : i32
    return %c0_i32, %c0_i32_0 : i32, i32
  }
  func.func @transform_11(%arg0: i32, %arg1: i32) -> (i32, i32) {
    %c0_i32 = arith.constant 0 : i32
    %c0_i32_0 = arith.constant 0 : i32
    %c0_i32_1 = arith.constant 0 : i32
    return %c0_i32, %c0_i32_0 : i32, i32
  }
  func.func @transform_12(%arg0: i32, %arg1: i32) -> (i32, i32) {
    %c0_i32 = arith.constant 0 : i32
    %c0_i32_0 = arith.constant 0 : i32
    %c0_i32_1 = arith.constant 0 : i32
    return %c0_i32, %c0_i32_0 : i32, i32
  }
  func.func @transform_13(%arg0: i32, %arg1: i32) -> (i32, i32) {
    %c0_i32 = arith.constant 0 : i32
    %c0_i32_0 = arith.constant 0 : i32
    %c0_i32_1 = arith.constant 0 : i32
    return %c0_i32, %c0_i32_0 : i32, i32
  }
  func.func @transform_14(%arg0: i32, %arg1: i32) -> (i32, i32, i32) {
    %c0_i32 = arith.constant 0 : i32
    %c0_i32_0 = arith.constant 0 : i32
    return %arg0, %arg1, %c0_i32 : i32, i32, i32
  }
}

</mosaic_0001>

<llo_original>
// kernel: tpu_custom_call.1
$region0: #{tpu_custom_call.1}
  #allocation0 [shape = 'u32[]', space=smem, size = 0x4, offset = 0x4, fixed_abs, tag = 'smem constant byte address 0x4 - core index']
  #allocation1 [shape = 'u32[144,128]{1,0:T(1,128)}', space=vmem, size = 0x12000, scoped, tag = 'internal scratch']
  %s0 = inlined_call_operand.vmem [shape: f32[2,8,32], index: 0, kind: input, shape index: {}]
  %s1 = inlined_call_operand.vmem [shape: f32[2,8,32], index: 1, kind: input, shape index: {}]
  %s2 = inlined_call_operand.vmem [shape: f32[1,32], index: 2, kind: input, shape index: {}]
  %s3 = inlined_call_operand.vmem [shape: f32[1,32], index: 3, kind: input, shape index: {}]
  %s4 = inlined_call_operand.vmem [shape: bf16[4,32,8], index: 4, kind: input, shape index: {}]
  %s5 = inlined_call_operand.vmem [shape: bf16[4,32,8], index: 5, kind: input, shape index: {}]
  %s6 = inlined_call_operand.vmem [shape: bf16[4,32,8], index: 6, kind: input, shape index: {}]
  %s7 = inlined_call_operand.vmem [shape: bf16[4,8,32], index: 7, kind: input, shape index: {}]
  %s8 = inlined_call_operand.vmem [shape: f32[1,32], index: 8, kind: input, shape index: {}]
  %s9 = inlined_call_operand.vmem [shape: f32[1,32], index: 9, kind: input, shape index: {}]
  %s10 = inlined_call_operand.vmem [shape: bf16[32,128], index: 10, kind: input, shape index: {}]
  %s11 = inlined_call_operand.vmem [shape: f32[1,128], index: 11, kind: input, shape index: {}]
  %s12 = inlined_call_operand.vmem [shape: bf16[128,32], index: 12, kind: input, shape index: {}]
  %s13 = inlined_call_operand.vmem [shape: f32[1,32], index: 13, kind: input, shape index: {}]
  %s14 = inlined_call_operand.hbm [shape: f32[2,8,32], index: 14, kind: output, shape index: {}]
  %s15 = sld [smem:[#allocation0]]
  $region89: #{tpu_custom_call.1} parent=0
    _
  %s17 = ssub.s32 1, %s15
  %s18 = scalar_select 0, %s17, %s15
  $region1: #{tpu_custom_call.1} parent=0
    #allocation2 [shape = 'u8[8192]{0}', space=vmem, size = 0x2000, scoped, tag = 'output window, operand 0']
    #allocation3 [shape = 's32[2]{0}', space=sflag, size = 0x8, scoped, tag = 'scoped memory for tpu_custom_call.1']
    %19 = vsyncpa [#allocation3], 0
    %s20 = scalar_lea.sflag [#allocation3], 1
    %21 = vsyncpa %s20, 0
    loop: start=0, step=1, limit=4
    $region2: #{tpu_custom_call.1} parent=1 // loop_pre_header
      _
    $region3: #{tpu_custom_call.1} parent=1 // loop_header
      %s23 = sphi 0, %s27
      %p24 = scmp.ge.s32.totalorder %s23, 4
      %s30 = sphi 0, %s42
      %s31 = sphi 0, %s38
      %s32 = sphi 0, %s30
      %s33 = sphi 0, %s31
      %s34 = sphi 0, %s32
      %s35 = sphi 0, %s33
      %s47 = sphi 0, %s49
      %s50 = sphi 0, %s47
      %s51 = sphi 0, %s50
      %s67 = sphi 0, %s51
      %s73 = sphi 0, %s75
      %s76 = sphi 0, %s73
      %s77 = sphi 0, %s76
      %s93 = sphi 0, %s77
      %s97 = sphi 0, %s97
      %s99 = sphi 0, %s97
      %s100 = sphi 0, %s99
      %s114 = sphi 0, %s100
      %s118 = sphi 0, %s118
      %s120 = sphi 0, %s118
      %s121 = sphi 0, %s120
      %s135 = sphi 0, %s121
      %s139 = sphi 0, %s139
      %s141 = sphi 0, %s139
      %s142 = sphi 0, %s141
      %s156 = sphi 0, %s142
      %s160 = sphi 0, %s160
      %s162 = sphi 0, %s160
      %s163 = sphi 0, %s162
      %s177 = sphi 0, %s163
      %s181 = sphi 0, %s181
      %s183 = sphi 0, %s181
      %s184 = sphi 0, %s183
      %s198 = sphi 0, %s184
      %s202 = sphi 0, %s202
      %s204 = sphi 0, %s202
      %s205 = sphi 0, %s204
      %s219 = sphi 0, %s205
      %s223 = sphi 0, %s223
      %s225 = sphi 0, %s223
      %s226 = sphi 0, %s225
      %s240 = sphi 0, %s226
      %s244 = sphi 0, %s244
      %s246 = sphi 0, %s244
      %s247 = sphi 0, %s246
      %s261 = sphi 0, %s247
      %s265 = sphi 0, %s265
      %s267 = sphi 0, %s265
      %s268 = sphi 0, %s267
      %s282 = sphi 0, %s268
      %s286 = sphi 0, %s286
      %s288 = sphi 0, %s286
      %s289 = sphi 0, %s288
      %s303 = sphi 0, %s289
      %s307 = sphi 0, %s307
      %s309 = sphi 0, %s307
      %s310 = sphi 0, %s309
      %s324 = sphi 0, %s310
      %s328 = sphi 0, %s328
      %s330 = sphi 0, %s328
      %s331 = sphi 0, %s330
      %s345 = sphi 0, %s331
      %s353 = sphi 0, %s355
      %s356 = sphi 0, %s353
      %s357 = sphi 0, %s356
      %s373 = sphi 0, %s357
    $region4: #{tpu_custom_call.1} parent=1 // loop_header_branch
      %26 = sbr.rel (%p24) target = $region8
    $region5: #{tpu_custom_call.1} parent=1 // loop_body
      %s28 = ssub.s32 %s23, 1
      %s29 = ssub.s32 %s23, 2
      %s36 = sadd.s32 1, %s31
      %p37 = scmp.ge.s32.totalorder %s36, 1
      %s38 = scalar_select %p37, 0, %s36
      %s39 = sadd.s32 1, %s30
      %s40 = scalar_select %p37, %s39, %s30
      %p41 = scmp.ge.s32.totalorder %s40, 2
      %s42 = scalar_select %p41, 0, %s40
      %s43 = ssub.s32 %s30, %s42
      %s44 = ssub.s32 %s31, %s38
      %s45 = sor.u32 %s43, %s44
      %p46 = scmp.eq.s32.totalorder %s45, 0
      %s48 = sadd.s32 %s47, 1
      %s49 = scalar_select %p46, %s47, %s48
      %p52 = pneg %p46
      %p53 = scmp.eq.s32.totalorder %s23, 1
      %p54 = por %p52, %p53
      %p55 = scmp.ne.s32.totalorder %s47, %s50
      %p56 = scmp.eq.s32.totalorder %s23, 0
      %p57 = por %p55, %p56
      %p58 = scmp.ne.s32.totalorder %s47, %s50
      %p59 = scmp.eq.s32.totalorder %s28, 1
      %p60 = por %p58, %p59
      %p61 = scmp.ne.s32.totalorder %s50, %s51
      %p62 = scmp.eq.s32.totalorder %s28, 0
      %p63 = por %p61, %p62
      %p64 = scmp.ne.s32.totalorder %s50, %s51
      %p65 = scmp.eq.s32.totalorder %s29, 1
      %p66 = por %p64, %p65
      %p68 = scmp.ne.s32.totalorder %s51, %s67
      %p69 = scmp.eq.s32.totalorder %s29, 0
      %p70 = por %p68, %p69
      %s71 = ssub.s32 %s30, %s42
      %p72 = scmp.eq.s32.totalorder %s71, 0
      %s74 = sadd.s32 %s73, 1
      %s75 = scalar_select %p72, %s73, %s74
      %p78 = pneg %p72
      %p79 = scmp.eq.s32.totalorder %s23, 1
      %p80 = por %p78, %p79
      %p81 = scmp.ne.s32.totalorder %s73, %s76
      %p82 = scmp.eq.s32.totalorder %s23, 0
      %p83 = por %p81, %p82
      %p84 = scmp.ne.s32.totalorder %s73, %s76
      %p85 = scmp.eq.s32.totalorder %s28, 1
      %p86 = por %p84, %p85
      %p87 = scmp.ne.s32.totalorder %s76, %s77
      %p88 = scmp.eq.s32.totalorder %s28, 0
      %p89 = por %p87, %p88
      %p90 = scmp.ne.s32.totalorder %s76, %s77
      %p91 = scmp.eq.s32.totalorder %s29, 1
      %p92 = por %p90, %p91
      %p94 = scmp.ne.s32.totalorder %s77, %s93
      %p95 = scmp.eq.s32.totalorder %s29, 0
      %p96 = por %p94, %p95
      %s98 = sadd.s32 %s97, 1
      %p101 = scmp.eq.s32.totalorder %s23, 1
      %p102 = scmp.ne.s32.totalorder %s97, %s99
      %p103 = scmp.eq.s32.totalorder %s23, 0
      %p104 = por %p102, %p103
      %p105 = scmp.ne.s32.totalorder %s97, %s99
      %p106 = scmp.eq.s32.totalorder %s28, 1
      %p107 = por %p105, %p106
      %p108 = scmp.ne.s32.totalorder %s99, %s100
      %p109 = scmp.eq.s32.totalorder %s28, 0
      %p110 = por %p108, %p109
      %p111 = scmp.ne.s32.totalorder %s99, %s100
      %p112 = scmp.eq.s32.totalorder %s29, 1
      %p113 = por %p111, %p112
      %p115 = scmp.ne.s32.totalorder %s100, %s114
      %p116 = scmp.eq.s32.totalorder %s29, 0
      %p117 = por %p115, %p116
      %s119 = sadd.s32 %s118, 1
      %p122 = scmp.eq.s32.totalorder %s23, 1
      %p123 = scmp.ne.s32.totalorder %s118, %s120
      %p124 = scmp.eq.s32.totalorder %s23, 0
      %p125 = por %p123, %p124
      %p126 = scmp.ne.s32.totalorder %s118, %s120
      %p127 = scmp.eq.s32.totalorder %s28, 1
      %p128 = por %p126, %p127
      %p129 = scmp.ne.s32.totalorder %s120, %s121
      %p130 = scmp.eq.s32.totalorder %s28, 0
      %p131 = por %p129, %p130
      %p132 = scmp.ne.s32.totalorder %s120, %s121
      %p133 = scmp.eq.s32.totalorder %s29, 1
      %p134 = por %p132, %p133
      %p136 = scmp.ne.s32.totalorder %s121, %s135
      %p137 = scmp.eq.s32.totalorder %s29, 0
      %p138 = por %p136, %p137
      %s140 = sadd.s32 %s139, 1
      %p143 = scmp.eq.s32.totalorder %s23, 1
      %p144 = scmp.ne.s32.totalorder %s139, %s141
      %p145 = scmp.eq.s32.totalorder %s23, 0
      %p146 = por %p144, %p145
      %p147 = scmp.ne.s32.totalorder %s139, %s141
      %p148 = scmp.eq.s32.totalorder %s28, 1
      %p149 = por %p147, %p148
      %p150 = scmp.ne.s32.totalorder %s141, %s142
      %p151 = scmp.eq.s32.totalorder %s28, 0
      %p152 = por %p150, %p151
      %p153 = scmp.ne.s32.totalorder %s141, %s142
      %p154 = scmp.eq.s32.totalorder %s29, 1
      %p155 = por %p153, %p154
      %p157 = scmp.ne.s32.totalorder %s142, %s156
      %p158 = scmp.eq.s32.totalorder %s29, 0
      %p159 = por %p157, %p158
      %s161 = sadd.s32 %s160, 1
      %p164 = scmp.eq.s32.totalorder %s23, 1
      %p165 = scmp.ne.s32.totalorder %s160, %s162
      %p166 = scmp.eq.s32.totalorder %s23, 0
      %p167 = por %p165, %p166
      %p168 = scmp.ne.s32.totalorder %s160, %s162
      %p169 = scmp.eq.s32.totalorder %s28, 1
      %p170 = por %p168, %p169
      %p171 = scmp.ne.s32.totalorder %s162, %s163
      %p172 = scmp.eq.s32.totalorder %s28, 0
      %p173 = por %p171, %p172
      %p174 = scmp.ne.s32.totalorder %s162, %s163
      %p175 = scmp.eq.s32.totalorder %s29, 1
      %p176 = por %p174, %p175
      %p178 = scmp.ne.s32.totalorder %s163, %s177
      %p179 = scmp.eq.s32.totalorder %s29, 0
      %p180 = por %p178, %p179
      %s182 = sadd.s32 %s181, 1
      %p185 = scmp.eq.s32.totalorder %s23, 1
      %p186 = scmp.ne.s32.totalorder %s181, %s183
      %p187 = scmp.eq.s32.totalorder %s23, 0
      %p188 = por %p186, %p187
      %p189 = scmp.ne.s32.totalorder %s181, %s183
      %p190 = scmp.eq.s32.totalorder %s28, 1
      %p191 = por %p189, %p190
      %p192 = scmp.ne.s32.totalorder %s183, %s184
      %p193 = scmp.eq.s32.totalorder %s28, 0
      %p194 = por %p192, %p193
      %p195 = scmp.ne.s32.totalorder %s183, %s184
      %p196 = scmp.eq.s32.totalorder %s29, 1
      %p197 = por %p195, %p196
      %p199 = scmp.ne.s32.totalorder %s184, %s198
      %p200 = scmp.eq.s32.totalorder %s29, 0
      %p201 = por %p199, %p200
      %s203 = sadd.s32 %s202, 1
      %p206 = scmp.eq.s32.totalorder %s23, 1
      %p207 = scmp.ne.s32.totalorder %s202, %s204
      %p208 = scmp.eq.s32.totalorder %s23, 0
      %p209 = por %p207, %p208
      %p210 = scmp.ne.s32.totalorder %s202, %s204
      %p211 = scmp.eq.s32.totalorder %s28, 1
      %p212 = por %p210, %p211
      %p213 = scmp.ne.s32.totalorder %s204, %s205
      %p214 = scmp.eq.s32.totalorder %s28, 0
      %p215 = por %p213, %p214
      %p216 = scmp.ne.s32.totalorder %s204, %s205
      %p217 = scmp.eq.s32.totalorder %s29, 1
      %p218 = por %p216, %p217
      %p220 = scmp.ne.s32.totalorder %s205, %s219
      %p221 = scmp.eq.s32.totalorder %s29, 0
      %p222 = por %p220, %p221
      %s224 = sadd.s32 %s223, 1
      %p227 = scmp.eq.s32.totalorder %s23, 1
      %p228 = scmp.ne.s32.totalorder %s223, %s225
      %p229 = scmp.eq.s32.totalorder %s23, 0
      %p230 = por %p228, %p229
      %p231 = scmp.ne.s32.totalorder %s223, %s225
      %p232 = scmp.eq.s32.totalorder %s28, 1
      %p233 = por %p231, %p232
      %p234 = scmp.ne.s32.totalorder %s225, %s226
      %p235 = scmp.eq.s32.totalorder %s28, 0
      %p236 = por %p234, %p235
      %p237 = scmp.ne.s32.totalorder %s225, %s226
      %p238 = scmp.eq.s32.totalorder %s29, 1
      %p239 = por %p237, %p238
      %p241 = scmp.ne.s32.totalorder %s226, %s240
      %p242 = scmp.eq.s32.totalorder %s29, 0
      %p243 = por %p241, %p242
      %s245 = sadd.s32 %s244, 1
      %p248 = scmp.eq.s32.totalorder %s23, 1
      %p249 = scmp.ne.s32.totalorder %s244, %s246
      %p250 = scmp.eq.s32.totalorder %s23, 0
      %p251 = por %p249, %p250
      %p252 = scmp.ne.s32.totalorder %s244, %s246
      %p253 = scmp.eq.s32.totalorder %s28, 1
      %p254 = por %p252, %p253
      %p255 = scmp.ne.s32.totalorder %s246, %s247
      %p256 = scmp.eq.s32.totalorder %s28, 0
      %p257 = por %p255, %p256
      %p258 = scmp.ne.s32.totalorder %s246, %s247
      %p259 = scmp.eq.s32.totalorder %s29, 1
      %p260 = por %p258, %p259
      %p262 = scmp.ne.s32.totalorder %s247, %s261
      %p263 = scmp.eq.s32.totalorder %s29, 0
      %p264 = por %p262, %p263
      %s266 = sadd.s32 %s265, 1
      %p269 = scmp.eq.s32.totalorder %s23, 1
      %p270 = scmp.ne.s32.totalorder %s265, %s267
      %p271 = scmp.eq.s32.totalorder %s23, 0
      %p272 = por %p270, %p271
      %p273 = scmp.ne.s32.totalorder %s265, %s267
      %p274 = scmp.eq.s32.totalorder %s28, 1
      %p275 = por %p273, %p274
      %p276 = scmp.ne.s32.totalorder %s267, %s268
      %p277 = scmp.eq.s32.totalorder %s28, 0
      %p278 = por %p276, %p277
      %p279 = scmp.ne.s32.totalorder %s267, %s268
      %p280 = scmp.eq.s32.totalorder %s29, 1
      %p281 = por %p279, %p280
      %p283 = scmp.ne.s32.totalorder %s268, %s282
      %p284 = scmp.eq.s32.totalorder %s29, 0
      %p285 = por %p283, %p284
      %s287 = sadd.s32 %s286, 1
      %p290 = scmp.eq.s32.totalorder %s23, 1
      %p291 = scmp.ne.s32.totalorder %s286, %s288
      %p292 = scmp.eq.s32.totalorder %s23, 0
      %p293 = por %p291, %p292
      %p294 = scmp.ne.s32.totalorder %s286, %s288
      %p295 = scmp.eq.s32.totalorder %s28, 1
      %p296 = por %p294, %p295
      %p297 = scmp.ne.s32.totalorder %s288, %s289
      %p298 = scmp.eq.s32.totalorder %s28, 0
      %p299 = por %p297, %p298
      %p300 = scmp.ne.s32.totalorder %s288, %s289
      %p301 = scmp.eq.s32.totalorder %s29, 1
      %p302 = por %p300, %p301
      %p304 = scmp.ne.s32.totalorder %s289, %s303
      %p305 = scmp.eq.s32.totalorder %s29, 0
      %p306 = por %p304, %p305
      %s308 = sadd.s32 %s307, 1
      %p311 = scmp.eq.s32.totalorder %s23, 1
      %p312 = scmp.ne.s32.totalorder %s307, %s309
      %p313 = scmp.eq.s32.totalorder %s23, 0
      %p314 = por %p312, %p313
      %p315 = scmp.ne.s32.totalorder %s307, %s309
      %p316 = scmp.eq.s32.totalorder %s28, 1
      %p317 = por %p315, %p316
      %p318 = scmp.ne.s32.totalorder %s309, %s310
      %p319 = scmp.eq.s32.totalorder %s28, 0
      %p320 = por %p318, %p319
      %p321 = scmp.ne.s32.totalorder %s309, %s310
      %p322 = scmp.eq.s32.totalorder %s29, 1
      %p323 = por %p321, %p322
      %p325 = scmp.ne.s32.totalorder %s310, %s324
      %p326 = scmp.eq.s32.totalorder %s29, 0
      %p327 = por %p325, %p326
      %s329 = sadd.s32 %s328, 1
      %p332 = scmp.eq.s32.totalorder %s23, 1
      %p333 = scmp.ne.s32.totalorder %s328, %s330
      %p334 = scmp.eq.s32.totalorder %s23, 0
      %p335 = por %p333, %p334
      %p336 = scmp.ne.s32.totalorder %s328, %s330
      %p337 = scmp.eq.s32.totalorder %s28, 1
      %p338 = por %p336, %p337
      %p339 = scmp.ne.s32.totalorder %s330, %s331
      %p340 = scmp.eq.s32.totalorder %s28, 0
      %p341 = por %p339, %p340
      %p342 = scmp.ne.s32.totalorder %s330, %s331
      %p343 = scmp.eq.s32.totalorder %s29, 1
      %p344 = por %p342, %p343
      %p346 = scmp.ne.s32.totalorder %s331, %s345
      %p347 = scmp.eq.s32.totalorder %s29, 0
      %p348 = por %p346, %p347
      %s349 = ssub.s32 %s30, %s42
      %s350 = ssub.s32 %s31, %s38
      %s351 = sor.u32 %s349, %s350
      %p352 = scmp.eq.s32.totalorder %s351, 0
      %s354 = sadd.s32 %s353, 1
      %s355 = scalar_select %p352, %s353, %s354
      %p358 = pneg %p352
      %p359 = scmp.eq.s32.totalorder %s23, 1
      %p360 = por %p358, %p359
      %p361 = scmp.ne.s32.totalorder %s353, %s356
      %p362 = scmp.eq.s32.totalorder %s23, 0
      %p363 = por %p361, %p362
      %p364 = scmp.ne.s32.totalorder %s353, %s356
      %p365 = scmp.eq.s32.totalorder %s28, 1
      %p366 = por %p364, %p365
      %p367 = scmp.ne.s32.totalorder %s356, %s357
      %p368 = scmp.eq.s32.totalorder %s28, 0
      %p369 = por %p367, %p368
      %p370 = scmp.ne.s32.totalorder %s356, %s357
      %p371 = scmp.eq.s32.totalorder %s29, 1
      %p372 = por %p370, %p371
      %p374 = scmp.ne.s32.totalorder %s357, %s373
      %p375 = scmp.eq.s32.totalorder %s29, 0
      %p376 = por %p374, %p375
      %p377 = scmp.le.s32.totalorder 1, %s23
      %p378 = scmp.lt.s32.totalorder %s23, 3
      %p379 = pnand %p377, %p378
      %p380 = pneg %p379
      // Predicated region
      $region9: #{tpu_custom_call.1} parent=5 // pred_check
        _
      $region10: #{tpu_custom_call.1} parent=5 // pred_check_branch
        %382 = sbr.rel (%p379) target = $region12
      $region11: #{tpu_custom_call.1} parent=5 // pred_region
        %s383 = ssub.s32 %s23, 1
        // Predicated region
        $region13: #{tpu_custom_call.1} parent=11 // pred_check
          %p384 = pneg %p110
        $region14: #{tpu_custom_call.1} parent=11 // pred_check_branch
          %386 = sbr.rel (%p384) target = $region16
        $region15: #{tpu_custom_call.1} parent=11 // pred_region
          _
        $region16: #{tpu_custom_call.1} parent=11 // pred_fallthru
          _
        // Predicated region
        $region17: #{tpu_custom_call.1} parent=11 // pred_check
          %p387 = pneg %p131
        $region18: #{tpu_custom_call.1} parent=11 // pred_check_branch
          %389 = sbr.rel (%p387) target = $region20
        $region19: #{tpu_custom_call.1} parent=11 // pred_region
          _
        $region20: #{tpu_custom_call.1} parent=11 // pred_fallthru
          _
        // Predicated region
        $region21: #{tpu_custom_call.1} parent=11 // pred_check
          %p390 = pneg %p152
        $region22: #{tpu_custom_call.1} parent=11 // pred_check_branch
          %392 = sbr.rel (%p390) target = $region24
        $region23: #{tpu_custom_call.1} parent=11 // pred_region
          _
        $region24: #{tpu_custom_call.1} parent=11 // pred_fallthru
          _
        // Predicated region
        $region25: #{tpu_custom_call.1} parent=11 // pred_check
          %p393 = pneg %p173
        $region26: #{tpu_custom_call.1} parent=11 // pred_check_branch
          %395 = sbr.rel (%p393) target = $region28
        $region27: #{tpu_custom_call.1} parent=11 // pred_region
          _
        $region28: #{tpu_custom_call.1} parent=11 // pred_fallthru
          _
        // Predicated region
        $region29: #{tpu_custom_call.1} parent=11 // pred_check
          %p396 = pneg %p194
        $region30: #{tpu_custom_call.1} parent=11 // pred_check_branch
          %398 = sbr.rel (%p396) target = $region32
        $region31: #{tpu_custom_call.1} parent=11 // pred_region
          _
        $region32: #{tpu_custom_call.1} parent=11 // pred_fallthru
          _
        // Predicated region
        $region33: #{tpu_custom_call.1} parent=11 // pred_check
          %p399 = pneg %p215
        $region34: #{tpu_custom_call.1} parent=11 // pred_check_branch
          %401 = sbr.rel (%p399) target = $region36
        $region35: #{tpu_custom_call.1} parent=11 // pred_region
          _
        $region36: #{tpu_custom_call.1} parent=11 // pred_fallthru
          _
        // Predicated region
        $region37: #{tpu_custom_call.1} parent=11 // pred_check
          %p402 = pneg %p236
        $region38: #{tpu_custom_call.1} parent=11 // pred_check_branch
          %404 = sbr.rel (%p402) target = $region40
        $region39: #{tpu_custom_call.1} parent=11 // pred_region
          _
        $region40: #{tpu_custom_call.1} parent=11 // pred_fallthru
          _
        // Predicated region
        $region41: #{tpu_custom_call.1} parent=11 // pred_check
          %p405 = pneg %p257
        $region42: #{tpu_custom_call.1} parent=11 // pred_check_branch
          %407 = sbr.rel (%p405) target = $region44
        $region43: #{tpu_custom_call.1} parent=11 // pred_region
          _
        $region44: #{tpu_custom_call.1} parent=11 // pred_fallthru
          _
        // Predicated region
        $region45: #{tpu_custom_call.1} parent=11 // pred_check
          %p408 = pneg %p278
        $region46: #{tpu_custom_call.1} parent=11 // pred_check_branch
          %410 = sbr.rel (%p408) target = $region48
        $region47: #{tpu_custom_call.1} parent=11 // pred_region
          _
        $region48: #{tpu_custom_call.1} parent=11 // pred_fallthru
          _
        // Predicated region
        $region49: #{tpu_custom_call.1} parent=11 // pred_check
          %p411 = pneg %p299
        $region50: #{tpu_custom_call.1} parent=11 // pred_check_branch
          %413 = sbr.rel (%p411) target = $region52
        $region51: #{tpu_custom_call.1} parent=11 // pred_region
          _
        $region52: #{tpu_custom_call.1} parent=11 // pred_fallthru
          _
        // Predicated region
        $region53: #{tpu_custom_call.1} parent=11 // pred_check
          %p414 = pneg %p320
        $region54: #{tpu_custom_call.1} parent=11 // pred_check_branch
          %416 = sbr.rel (%p414) target = $region56
        $region55: #{tpu_custom_call.1} parent=11 // pred_region
          _
        $region56: #{tpu_custom_call.1} parent=11 // pred_fallthru
          _
        // Predicated region
        $region57: #{tpu_custom_call.1} parent=11 // pred_check
          %p417 = pneg %p341
        $region58: #{tpu_custom_call.1} parent=11 // pred_check_branch
          %419 = sbr.rel (%p417) target = $region60
        $region59: #{tpu_custom_call.1} parent=11 // pred_region
          _
        $region60: #{tpu_custom_call.1} parent=11 // pred_fallthru
          _
      $region12: #{tpu_custom_call.1} parent=5 // pred_fallthru
        _
      %p420 = scmp.lt.s32.totalorder %s23, 2
      // Predicated region
      $region61: #{tpu_custom_call.1} parent=5 // pred_check
        %p421 = pneg %p420
      $region62: #{tpu_custom_call.1} parent=5 // pred_check_branch
        %423 = sbr.rel (%p421) target = $region64
      $region63: #{tpu_custom_call.1} parent=5 // pred_region
        // Predicated region
        $region65: #{tpu_custom_call.1} parent=63 // pred_check
          %p424 = pneg %p57
        $region66: #{tpu_custom_call.1} parent=63 // pred_check_branch
          %426 = sbr.rel (%p424) target = $region68
        $region67: #{tpu_custom_call.1} parent=63 // pred_region
          %p427 = scmp.lt.s32.totalorder %s30, 1
          %s428 = scalar_select %p427, %s30, 1
          %p429 = scmp.lt.s32.totalorder %s31, 0
          %s430 = scalar_select %p429, %s31, 0
          %s431 = sadd.s32 %s430, %s428
          %s432 = smul.addr %s431, 8
          %s433 = scalar_lea.vmem %s0, %s432
        $region68: #{tpu_custom_call.1} parent=63 // pred_fallthru
          _
        // Predicated region
        $region69: #{tpu_custom_call.1} parent=63 // pred_check
          %p434 = pneg %p83
        $region70: #{tpu_custom_call.1} parent=63 // pred_check_branch
          %436 = sbr.rel (%p434) target = $region72
        $region71: #{tpu_custom_call.1} parent=63 // pred_region
          %p437 = scmp.lt.s32.totalorder %s30, 1
          %s438 = scalar_select %p437, %s30, 1
          %s439 = smul.addr %s438, 8
          %s440 = scalar_lea.vmem %s1, %s439
        $region72: #{tpu_custom_call.1} parent=63 // pred_fallthru
          _
      $region64: #{tpu_custom_call.1} parent=5 // pred_fallthru
        _
      %p441 = scmp.le.s32.totalorder 1, %s23
      %p442 = scmp.lt.s32.totalorder %s23, 3
      %p443 = pnand %p441, %p442
      %p444 = pneg %p443
      // Predicated region
      $region73: #{tpu_custom_call.1} parent=5 // pred_check
        _
      $region74: #{tpu_custom_call.1} parent=5 // pred_check_branch
        %446 = sbr.rel (%p443) target = $region76
      $region75: #{tpu_custom_call.1} parent=5 // pred_region
        %s447 = ssub.s32 %s23, 1
        %p448 = scmp.lt.s32.totalorder %s32, 1
        %s449 = scalar_select %p448, %s32, 1
        %p450 = scmp.lt.s32.totalorder %s33, 0
        %s451 = scalar_select %p450, %s33, 0
        %s452 = sadd.s32 %s451, %s449
        %s453 = smul.addr %s452, 8
        %s454 = scalar_lea.vmem %s0, %s453
        %p455 = pneg %p63
        %p456 = pneg %p60
        %p457 = scmp.lt.s32.totalorder %s32, 1
        %s458 = scalar_select %p457, %s32, 1
        %s459 = smul.addr %s458, 8
        %s460 = scalar_lea.vmem %s1, %s459
        %p461 = pneg %p89
        %p462 = pneg %p86
        %p463 = pneg %p110
        %p464 = pneg %p107
        %p465 = pneg %p131
        %p466 = pneg %p128
        %p467 = pneg %p152
        %p468 = pneg %p149
        %p469 = pneg %p173
        %p470 = pneg %p170
        %p471 = pneg %p194
        %p472 = pneg %p191
        %p473 = pneg %p215
        %p474 = pneg %p212
        %p475 = pneg %p236
        %p476 = pneg %p233
        %p477 = pneg %p257
        %p478 = pneg %p254
        %p479 = pneg %p278
        %p480 = pneg %p275
        %p481 = pneg %p299
        %p482 = pneg %p296
        %p483 = pneg %p320
        %p484 = pneg %p317
        %p485 = pneg %p341
        %p486 = pneg %p338
        %p487 = pneg %p369
        %p488 = pneg %p366
        %s489 = sand.u32 %s356, 1
        %s490 = scalar_lea.sflag [#allocation3], %s489
        %s491 = sand.u32 %s356, 1
        %s492 = smul.addr %s491, 8
        %s493 = scalar_lea.vmem [#allocation2], %s492
        %p494 = scmp.lt.s32.totalorder %s32, 1
        %s495 = scalar_select %p494, %s32, 1
        %p496 = scmp.lt.s32.totalorder %s33, 0
        %s497 = scalar_select %p496, %s33, 0
        %s498 = sadd.s32 %s497, %s495
        %s499 = smul.addr %s498, 8
        %s500 = scalar_lea.vmem %s0, %s499
        %p501 = scmp.lt.s32.totalorder %s32, 1
        %s502 = scalar_select %p501, %s32, 1
        %s503 = smul.addr %s502, 8
        %s504 = scalar_lea.vmem %s1, %s503
        %v506 = vld [vmem:[%s500] sm:$0xff]
        %v507 = vld [vmem:[%s504] sm:$0xff]
        %v508 = vld [vmem:[%s2] sm:$0x1]
        %v509 = vld [vmem:[%s3] sm:$0x1]
        %vm510 = vcmask 261120
        %v511 = vsel %vm510, %v506, 0.0
        %512 = vadd.xlane.f32.xlu0 %v511
        %v513 = vpop.xlane.xlu0 %512
        %v514 = vrcp.pop 32.0
        %v515 = vmul.f32 %v513, %v514
        %v516 = vsub.f32 %v506, %v515
        %v517 = vmul.f32 %v516, %v516
        %v518 = vsel %vm510, %v517, 0.0
        %519 = vadd.xlane.f32.xlu0 %v518
        %v520 = vpop.xlane.xlu0 %519
        %v521 = vmul.f32 %v520, %v514
        %v522 = vadd.f32 %v521, 1e-05
        %v523 = vrsqrt.pop %v522
        %v524 = vmul.f32 %v516, %v523
        %v526 = vlaneseq
        %v527 = vshrl.u32 %v526, 7
        %v528 = vsub.s32 0, %v527
        %v529 = vrot.slane %v508, %v528
        %v531 = vmul.f32 %v524, %v529
        %v533 = vlaneseq
        %v534 = vshrl.u32 %v533, 7
        %v535 = vsub.s32 0, %v534
        %v536 = vrot.slane %v509, %v535
        %v538 = vadd.f32 %v531, %v536
        %v539 = vpack.c.bf16 %v538, %v538
        %v540 = vsel %vm510, %v507, 0.0
        %541 = vadd.xlane.f32.xlu0 %v540
        %v542 = vpop.xlane.xlu0 %541
        %v543 = vmul.f32 %v542, %v514
        %v544 = vsub.f32 %v507, %v543
        %v545 = vmul.f32 %v544, %v544
        %v546 = vsel %vm510, %v545, 0.0
        %547 = vadd.xlane.f32.xlu0 %v546
        %v548 = vpop.xlane.xlu0 %547
        %v549 = vmul.f32 %v548, %v514
        %v550 = vadd.f32 %v549, 1e-05
        %v551 = vrsqrt.pop %v550
        %v552 = vmul.f32 %v544, %v551
        %v553 = vmul.f32 %v552, %v529
        %v554 = vadd.f32 %v553, %v536
        %v555 = vpack.c.bf16 %v554, %v554
        %v556 = vld [vmem:[%s4] sm:$0xf]
        %v557 = vld [vmem:[%s4 + $0x4] sm:$0xf]
        %v558 = vld [vmem:[%s4 + $0x8] sm:$0xf]
        %v559 = vld [vmem:[%s4 + $0xc] sm:$0xf]
        %v564 = vunpack.c.l.b16 %v556
        %v565 = vunpack.c.l.b16 %v557
        %v566 = vunpack.c.l.b16 %v558
        %v567 = vunpack.c.l.b16 %v559
        %v568 = vpack.c.b16 %v565, %v564
        %v569 = vpack.c.b16 %v567, %v566
        %v573 = vsel %vm510, %v539, 0
        %575 = vmatprep.subr.bf16.mxu0 0
        %576 = vmatpush1.bf16.msra.mxu0 %v568
        %577 = vmatprep.subr.bf16.mxu0 0
        %578 = vmatpush1.bf16.msra.mxu0 %v569
        %579 = vmatprep.subr.bf16.mxu0 0
        %580 = vmatpush1.bf16.msra.mxu0 0
        %581 = vmatprep.subr.bf16.mxu0 0
        %582 = vmatpush1.bf16.msra.mxu0 0
        %583 = vmatprep.subr.bf16.mxu0 0
        %584 = vmatpush1.bf16.msra.mxu0 0
        %585 = vmatprep.subr.bf16.mxu0 0
        %586 = vmatpush1.bf16.msra.mxu0 0
        %587 = vmatprep.subr.bf16.mxu0 0
        %588 = vmatpush1.bf16.msra.mxu0 0
        %589 = vmatprep.subr.bf16.mxu0 0
        %590 = vmatpush1.bf16.msra.mxu0 0
        %591 = vmatprep.subr.bf16.mxu0 0
        %592 = vmatpush1.bf16.msra.mxu0 0
        %593 = vmatprep.subr.bf16.mxu0 0
        %594 = vmatpush1.bf16.msra.mxu0 0
        %595 = vmatprep.subr.bf16.mxu0 0
        %596 = vmatpush1.bf16.msra.mxu0 0
        %597 = vmatprep.subr.bf16.mxu0 0
        %598 = vmatpush1.bf16.msra.mxu0 0
        %599 = vmatprep.subr.bf16.mxu0 0
        %600 = vmatpush1.bf16.msra.mxu0 0
        %601 = vmatprep.subr.bf16.mxu0 0
        %602 = vmatpush1.bf16.msra.mxu0 0
        %603 = vmatprep.subr.bf16.mxu0 0
        %604 = vmatpush1.bf16.msra.mxu0 0
        %605 = vmatprep.subr.bf16.mxu0 0
        %606 = vmatpush1.bf16.msra.mxu0 0
        %607 = vmatprep.mubr.bf16.mxu0 0
        %608 = vmatmul.mubr.bf16.gmra.mrb[0].mxu0 %v573
        %v609 = vpop.f32.mrb[0].mxu0
        %v610 = vadd.f32 0.0, %v609
        %v611 = vpop.f32.mrb[0].mxu0
        %v612 = vpop.f32.mrb[0].mxu0
        %v613 = vpop.f32.mrb[0].mxu0
        %614 = vdwg.mxu0
        %v615 = vpack.c.bf16 %v610, %v610
        %v616 = vld [vmem:[%s5] sm:$0xf]
        %v617 = vld [vmem:[%s5 + $0x4] sm:$0xf]
        %v618 = vld [vmem:[%s5 + $0x8] sm:$0xf]
        %v619 = vld [vmem:[%s5 + $0xc] sm:$0xf]
        %v624 = vunpack.c.l.b16 %v616
        %v625 = vunpack.c.l.b16 %v617
        %v626 = vunpack.c.l.b16 %v618
        %v627 = vunpack.c.l.b16 %v619
        %v628 = vpack.c.b16 %v625, %v624
        %v629 = vpack.c.b16 %v627, %v626
        %v633 = vsel %vm510, %v555, 0
        %635 = vmatprep.subr.bf16.mxu0 0
        %636 = vmatpush1.bf16.msra.mxu0 %v628
        %637 = vmatprep.subr.bf16.mxu0 0
        %638 = vmatpush1.bf16.msra.mxu0 %v629
        %639 = vmatprep.subr.bf16.mxu0 0
        %640 = vmatpush1.bf16.msra.mxu0 0
        %641 = vmatprep.subr.bf16.mxu0 0
        %642 = vmatpush1.bf16.msra.mxu0 0
        %643 = vmatprep.subr.bf16.mxu0 0
        %644 = vmatpush1.bf16.msra.mxu0 0
        %645 = vmatprep.subr.bf16.mxu0 0
        %646 = vmatpush1.bf16.msra.mxu0 0
        %647 = vmatprep.subr.bf16.mxu0 0
        %648 = vmatpush1.bf16.msra.mxu0 0
        %649 = vmatprep.subr.bf16.mxu0 0
        %650 = vmatpush1.bf16.msra.mxu0 0
        %651 = vmatprep.subr.bf16.mxu0 0
        %652 = vmatpush1.bf16.msra.mxu0 0
        %653 = vmatprep.subr.bf16.mxu0 0
        %654 = vmatpush1.bf16.msra.mxu0 0
        %655 = vmatprep.subr.bf16.mxu0 0
        %656 = vmatpush1.bf16.msra.mxu0 0
        %657 = vmatprep.subr.bf16.mxu0 0
        %658 = vmatpush1.bf16.msra.mxu0 0
        %659 = vmatprep.subr.bf16.mxu0 0
        %660 = vmatpush1.bf16.msra.mxu0 0
        %661 = vmatprep.subr.bf16.mxu0 0
        %662 = vmatpush1.bf16.msra.mxu0 0
        %663 = vmatprep.subr.bf16.mxu0 0
        %664 = vmatpush1.bf16.msra.mxu0 0
        %665 = vmatprep.subr.bf16.mxu0 0
        %666 = vmatpush1.bf16.msra.mxu0 0
        %667 = vmatprep.mubr.bf16.mxu0 0
        %668 = vmatmul.mubr.bf16.gmra.mrb[0].mxu0 %v633
        %v669 = vpop.f32.mrb[0].mxu0
        %v670 = vadd.f32 0.0, %v669
        %v671 = vpop.f32.mrb[0].mxu0
        %v672 = vpop.f32.mrb[0].mxu0
        %v673 = vpop.f32.mrb[0].mxu0
        %674 = vdwg.mxu0
        %v675 = vpack.c.bf16 %v670, %v670
        %v676 = vld [vmem:[%s6] sm:$0xf]
        %v677 = vld [vmem:[%s6 + $0x4] sm:$0xf]
        %v678 = vld [vmem:[%s6 + $0x8] sm:$0xf]
        %v679 = vld [vmem:[%s6 + $0xc] sm:$0xf]
        %v684 = vunpack.c.l.b16 %v676
        %v685 = vunpack.c.l.b16 %v677
        %v686 = vunpack.c.l.b16 %v678
        %v687 = vunpack.c.l.b16 %v679
        %v688 = vpack.c.b16 %v685, %v684
        %v689 = vpack.c.b16 %v687, %v686
        %692 = vmatprep.subr.bf16.mxu0 0
        %693 = vmatpush1.bf16.msra.mxu0 %v688
        %694 = vmatprep.subr.bf16.mxu0 0
        %695 = vmatpush1.bf16.msra.mxu0 %v689
        %696 = vmatprep.subr.bf16.mxu0 0
        %697 = vmatpush1.bf16.msra.mxu0 0
        %698 = vmatprep.subr.bf16.mxu0 0
        %699 = vmatpush1.bf16.msra.mxu0 0
        %700 = vmatprep.subr.bf16.mxu0 0
        %701 = vmatpush1.bf16.msra.mxu0 0
        %702 = vmatprep.subr.bf16.mxu0 0
        %703 = vmatpush1.bf16.msra.mxu0 0
        %704 = vmatprep.subr.bf16.mxu0 0
        %705 = vmatpush1.bf16.msra.mxu0 0
        %706 = vmatprep.subr.bf16.mxu0 0
        %707 = vmatpush1.bf16.msra.mxu0 0
        %708 = vmatprep.subr.bf16.mxu0 0
        %709 = vmatpush1.bf16.msra.mxu0 0
        %710 = vmatprep.subr.bf16.mxu0 0
        %711 = vmatpush1.bf16.msra.mxu0 0
        %712 = vmatprep.subr.bf16.mxu0 0
        %713 = vmatpush1.bf16.msra.mxu0 0
        %714 = vmatprep.subr.bf16.mxu0 0
        %715 = vmatpush1.bf16.msra.mxu0 0
        %716 = vmatprep.subr.bf16.mxu0 0
        %717 = vmatpush1.bf16.msra.mxu0 0
        %718 = vmatprep.subr.bf16.mxu0 0
        %719 = vmatpush1.bf16.msra.mxu0 0
        %720 = vmatprep.subr.bf16.mxu0 0
        %721 = vmatpush1.bf16.msra.mxu0 0
        %722 = vmatprep.subr.bf16.mxu0 0
        %723 = vmatpush1.bf16.msra.mxu0 0
        %724 = vmatprep.mubr.bf16.mxu0 0
        %725 = vmatmul.mubr.bf16.gmra.mrb[0].mxu0 %v633
        %v726 = vpop.f32.mrb[0].mxu0
        %v727 = vadd.f32 0.0, %v726
        %v728 = vpop.f32.mrb[0].mxu0
        %v729 = vpop.f32.mrb[0].mxu0
        %v730 = vpop.f32.mrb[0].mxu0
        %731 = vdwg.mxu0
        %v732 = vpack.c.bf16 %v727, %v727
        %vm733 = vcmask 64512
        %v735 = vsel %vm733, %v615, 0
        %v738 = vsel %vm733, %v675, 0
        %740 = vmatprep.subr.bf16.mxu0 0
        %741 = vmatpush1.bf16.xpose.msra.mxu0 %v738
        %742 = vmatprep.subr.bf16.mxu0 0
        %743 = vmatpush1.bf16.xpose.msra.mxu0 0
        %744 = vmatprep.subr.bf16.mxu0 0
        %745 = vmatpush1.bf16.xpose.msra.mxu0 0
        %746 = vmatprep.subr.bf16.mxu0 0
        %747 = vmatpush1.bf16.xpose.msra.mxu0 0
        %748 = vmatprep.subr.bf16.mxu0 0
        %749 = vmatpush1.bf16.xpose.msra.mxu0 0
        %750 = vmatprep.subr.bf16.mxu0 0
        %751 = vmatpush1.bf16.xpose.msra.mxu0 0
        %752 = vmatprep.subr.bf16.mxu0 0
        %753 = vmatpush1.bf16.xpose.msra.mxu0 0
        %754 = vmatprep.subr.bf16.mxu0 0
        %755 = vmatpush1.bf16.xpose.msra.mxu0 0
        %756 = vmatprep.subr.bf16.mxu0 0
        %757 = vmatpush1.bf16.xpose.msra.mxu0 0
        %758 = vmatprep.subr.bf16.mxu0 0
        %759 = vmatpush1.bf16.xpose.msra.mxu0 0
        %760 = vmatprep.subr.bf16.mxu0 0
        %761 = vmatpush1.bf16.xpose.msra.mxu0 0
        %762 = vmatprep.subr.bf16.mxu0 0
        %763 = vmatpush1.bf16.xpose.msra.mxu0 0
        %764 = vmatprep.subr.bf16.mxu0 0
        %765 = vmatpush1.bf16.xpose.msra.mxu0 0
        %766 = vmatprep.subr.bf16.mxu0 0
        %767 = vmatpush1.bf16.xpose.msra.mxu0 0
        %768 = vmatprep.subr.bf16.mxu0 0
        %769 = vmatpush1.bf16.xpose.msra.mxu0 0
        %770 = vmatprep.subr.bf16.mxu0 0
        %771 = vmatpush1.bf16.xpose.msra.mxu0 0
        %772 = vmatprep.mubr.bf16.mxu0 0
        %773 = vmatmul.mubr.bf16.gmra.mrb[0].mxu0 %v735
        %v774 = vpop.f32.mrb[0].mxu0
        %v775 = vadd.f32 0.0, %v774
        %v776 = vpop.f32.mrb[0].mxu0
        %v777 = vpop.f32.mrb[0].mxu0
        %v778 = vpop.f32.mrb[0].mxu0
        %779 = vdwg.mxu0
        %v780 = vmul.f32 %v775, 0.17677669
        %v781 = vsel %vm733, %v780, -inf
        %782 = vmax.xlane.f32.xlu0 %v781
        %v783 = vpop.xlane.xlu0 %782
        %v784 = vsub.f32 -inf, %v783
        %v785 = vmul.f32 %v784, 1.442695
        %v786 = vpow.pop %v785
        %v787 = vsub.f32 %v780, %v783
        %v788 = vmul.f32 %v787, 1.442695
        %v789 = vpow.pop %v788
        %v790 = vmul.f32 %v786, 0.0
        %v791 = vsel %vm733, %v789, 0.0
        %792 = vadd.xlane.f32.xlu0 %v791
        %v793 = vpop.xlane.xlu0 %792
        %v794 = vadd.f32 %v790, %v793
        %v795 = vpack.c.bf16 %v789, %v789
        %v797 = vsel %vm733, %v795, 0
        %vm799 = vcmask 1043456
        %v801 = vsel %vm799, %v732, 0
        %803 = vmatprep.subr.bf16.mxu0 0
        %804 = vmatpush1.bf16.msra.mxu0 %v801
        %805 = vmatprep.subr.bf16.mxu0 0
        %806 = vmatpush1.bf16.msra.mxu0 0
        %807 = vmatprep.subr.bf16.mxu0 0
        %808 = vmatpush1.bf16.msra.mxu0 0
        %809 = vmatprep.subr.bf16.mxu0 0
        %810 = vmatpush1.bf16.msra.mxu0 0
        %811 = vmatprep.subr.bf16.mxu0 0
        %812 = vmatpush1.bf16.msra.mxu0 0
        %813 = vmatprep.subr.bf16.mxu0 0
        %814 = vmatpush1.bf16.msra.mxu0 0
        %815 = vmatprep.subr.bf16.mxu0 0
        %816 = vmatpush1.bf16.msra.mxu0 0
        %817 = vmatprep.subr.bf16.mxu0 0
        %818 = vmatpush1.bf16.msra.mxu0 0
        %819 = vmatprep.subr.bf16.mxu0 0
        %820 = vmatpush1.bf16.msra.mxu0 0
        %821 = vmatprep.subr.bf16.mxu0 0
        %822 = vmatpush1.bf16.msra.mxu0 0
        %823 = vmatprep.subr.bf16.mxu0 0
        %824 = vmatpush1.bf16.msra.mxu0 0
        %825 = vmatprep.subr.bf16.mxu0 0
        %826 = vmatpush1.bf16.msra.mxu0 0
        %827 = vmatprep.subr.bf16.mxu0 0
        %828 = vmatpush1.bf16.msra.mxu0 0
        %829 = vmatprep.subr.bf16.mxu0 0
        %830 = vmatpush1.bf16.msra.mxu0 0
        %831 = vmatprep.subr.bf16.mxu0 0
        %832 = vmatpush1.bf16.msra.mxu0 0
        %833 = vmatprep.subr.bf16.mxu0 0
        %834 = vmatpush1.bf16.msra.mxu0 0
        %835 = vmatprep.mubr.bf16.mxu0 0
        %836 = vmatmul.mubr.bf16.gmra.mrb[0].mxu0 %v797
        %v837 = vpop.f32.mrb[0].mxu0
        %v838 = vadd.f32 0.0, %v837
        %v839 = vpop.f32.mrb[0].mxu0
        %v840 = vpop.f32.mrb[0].mxu0
        %v841 = vpop.f32.mrb[0].mxu0
        %842 = vdwg.mxu0
        %v843 = vadd.f32 %v790, %v838
        %v844 = vrcp.pop %v794
        %v845 = vmul.f32 %v843, %v844
        %v846 = vpack.c.bf16 %v845, %v845
        %v847 = vld [vmem:[%s7] sm:$0xf]
        %s848 = scalar_lea.vmem %s4, 16
        %v849 = vld [vmem:[%s848] sm:$0xf]
        %v850 = vld [vmem:[%s848 + $0x4] sm:$0xf]
        %v851 = vld [vmem:[%s848 + $0x8] sm:$0xf]
        %v852 = vld [vmem:[%s848 + $0xc] sm:$0xf]
        %v857 = vunpack.c.l.b16 %v849
        %v858 = vunpack.c.l.b16 %v850
        %v859 = vunpack.c.l.b16 %v851
        %v860 = vunpack.c.l.b16 %v852
        %v861 = vpack.c.b16 %v858, %v857
        %v862 = vpack.c.b16 %v860, %v859
        %865 = vmatprep.subr.bf16.mxu0 0
        %866 = vmatpush1.bf16.msra.mxu0 %v861
        %867 = vmatprep.subr.bf16.mxu0 0
        %868 = vmatpush1.bf16.msra.mxu0 %v862
        %869 = vmatprep.subr.bf16.mxu0 0
        %870 = vmatpush1.bf16.msra.mxu0 0
        %871 = vmatprep.subr.bf16.mxu0 0
        %872 = vmatpush1.bf16.msra.mxu0 0
        %873 = vmatprep.subr.bf16.mxu0 0
        %874 = vmatpush1.bf16.msra.mxu0 0
        %875 = vmatprep.subr.bf16.mxu0 0
        %876 = vmatpush1.bf16.msra.mxu0 0
        %877 = vmatprep.subr.bf16.mxu0 0
        %878 = vmatpush1.bf16.msra.mxu0 0
        %879 = vmatprep.subr.bf16.mxu0 0
        %880 = vmatpush1.bf16.msra.mxu0 0
        %881 = vmatprep.subr.bf16.mxu0 0
        %882 = vmatpush1.bf16.msra.mxu0 0
        %883 = vmatprep.subr.bf16.mxu0 0
        %884 = vmatpush1.bf16.msra.mxu0 0
        %885 = vmatprep.subr.bf16.mxu0 0
        %886 = vmatpush1.bf16.msra.mxu0 0
        %887 = vmatprep.subr.bf16.mxu0 0
        %888 = vmatpush1.bf16.msra.mxu0 0
        %889 = vmatprep.subr.bf16.mxu0 0
        %890 = vmatpush1.bf16.msra.mxu0 0
        %891 = vmatprep.subr.bf16.mxu0 0
        %892 = vmatpush1.bf16.msra.mxu0 0
        %893 = vmatprep.subr.bf16.mxu0 0
        %894 = vmatpush1.bf16.msra.mxu0 0
        %895 = vmatprep.subr.bf16.mxu0 0
        %896 = vmatpush1.bf16.msra.mxu0 0
        %897 = vmatprep.mubr.bf16.mxu0 0
        %898 = vmatmul.mubr.bf16.gmra.mrb[0].mxu0 %v573
        %v899 = vpop.f32.mrb[0].mxu0
        %v900 = vadd.f32 0.0, %v899
        %v901 = vpop.f32.mrb[0].mxu0
        %v902 = vpop.f32.mrb[0].mxu0
        %v903 = vpop.f32.mrb[0].mxu0
        %904 = vdwg.mxu0
        %v905 = vpack.c.bf16 %v900, %v900
        %s906 = scalar_lea.vmem %s5, 16
        %v907 = vld [vmem:[%s906] sm:$0xf]
        %v908 = vld [vmem:[%s906 + $0x4] sm:$0xf]
        %v909 = vld [vmem:[%s906 + $0x8] sm:$0xf]
        %v910 = vld [vmem:[%s906 + $0xc] sm:$0xf]
        %v915 = vunpack.c.l.b16 %v907
        %v916 = vunpack.c.l.b16 %v908
        %v917 = vunpack.c.l.b16 %v909
        %v918 = vunpack.c.l.b16 %v910
        %v919 = vpack.c.b16 %v916, %v915
        %v920 = vpack.c.b16 %v918, %v917
        %923 = vmatprep.subr.bf16.mxu0 0
        %924 = vmatpush1.bf16.msra.mxu0 %v919
        %925 = vmatprep.subr.bf16.mxu0 0
        %926 = vmatpush1.bf16.msra.mxu0 %v920
        %927 = vmatprep.subr.bf16.mxu0 0
        %928 = vmatpush1.bf16.msra.mxu0 0
        %929 = vmatprep.subr.bf16.mxu0 0
        %930 = vmatpush1.bf16.msra.mxu0 0
        %931 = vmatprep.subr.bf16.mxu0 0
        %932 = vmatpush1.bf16.msra.mxu0 0
        %933 = vmatprep.subr.bf16.mxu0 0
        %934 = vmatpush1.bf16.msra.mxu0 0
        %935 = vmatprep.subr.bf16.mxu0 0
        %936 = vmatpush1.bf16.msra.mxu0 0
        %937 = vmatprep.subr.bf16.mxu0 0
        %938 = vmatpush1.bf16.msra.mxu0 0
        %939 = vmatprep.subr.bf16.mxu0 0
        %940 = vmatpush1.bf16.msra.mxu0 0
        %941 = vmatprep.subr.bf16.mxu0 0
        %942 = vmatpush1.bf16.msra.mxu0 0
        %943 = vmatprep.subr.bf16.mxu0 0
        %944 = vmatpush1.bf16.msra.mxu0 0
        %945 = vmatprep.subr.bf16.mxu0 0
        %946 = vmatpush1.bf16.msra.mxu0 0
        %947 = vmatprep.subr.bf16.mxu0 0
        %948 = vmatpush1.bf16.msra.mxu0 0
        %949 = vmatprep.subr.bf16.mxu0 0
        %950 = vmatpush1.bf16.msra.mxu0 0
        %951 = vmatprep.subr.bf16.mxu0 0
        %952 = vmatpush1.bf16.msra.mxu0 0
        %953 = vmatprep.subr.bf16.mxu0 0
        %954 = vmatpush1.bf16.msra.mxu0 0
        %955 = vmatprep.mubr.bf16.mxu0 0
        %956 = vmatmul.mubr.bf16.gmra.mrb[0].mxu0 %v633
        %v957 = vpop.f32.mrb[0].mxu0
        %v958 = vadd.f32 0.0, %v957
        %v959 = vpop.f32.mrb[0].mxu0
        %v960 = vpop.f32.mrb[0].mxu0
        %v961 = vpop.f32.mrb[0].mxu0
        %962 = vdwg.mxu0
        %v963 = vpack.c.bf16 %v958, %v958
        %s964 = scalar_lea.vmem %s6, 16
        %v965 = vld [vmem:[%s964] sm:$0xf]
        %v966 = vld [vmem:[%s964 + $0x4] sm:$0xf]
        %v967 = vld [vmem:[%s964 + $0x8] sm:$0xf]
        %v968 = vld [vmem:[%s964 + $0xc] sm:$0xf]
        %v973 = vunpack.c.l.b16 %v965
        %v974 = vunpack.c.l.b16 %v966
        %v975 = vunpack.c.l.b16 %v967
        %v976 = vunpack.c.l.b16 %v968
        %v977 = vpack.c.b16 %v974, %v973
        %v978 = vpack.c.b16 %v976, %v975
        %981 = vmatprep.subr.bf16.mxu0 0
        %982 = vmatpush1.bf16.msra.mxu0 %v977
        %983 = vmatprep.subr.bf16.mxu0 0
        %984 = vmatpush1.bf16.msra.mxu0 %v978
        %985 = vmatprep.subr.bf16.mxu0 0
        %986 = vmatpush1.bf16.msra.mxu0 0
        %987 = vmatprep.subr.bf16.mxu0 0
        %988 = vmatpush1.bf16.msra.mxu0 0
        %989 = vmatprep.subr.bf16.mxu0 0
        %990 = vmatpush1.bf16.msra.mxu0 0
        %991 = vmatprep.subr.bf16.mxu0 0
        %992 = vmatpush1.bf16.msra.mxu0 0
        %993 = vmatprep.subr.bf16.mxu0 0
        %994 = vmatpush1.bf16.msra.mxu0 0
        %995 = vmatprep.subr.bf16.mxu0 0
        %996 = vmatpush1.bf16.msra.mxu0 0
        %997 = vmatprep.subr.bf16.mxu0 0
        %998 = vmatpush1.bf16.msra.mxu0 0
        %999 = vmatprep.subr.bf16.mxu0 0
        %1000 = vmatpush1.bf16.msra.mxu0 0
        %1001 = vmatprep.subr.bf16.mxu0 0
        %1002 = vmatpush1.bf16.msra.mxu0 0
        %1003 = vmatprep.subr.bf16.mxu0 0
        %1004 = vmatpush1.bf16.msra.mxu0 0
        %1005 = vmatprep.subr.bf16.mxu0 0
        %1006 = vmatpush1.bf16.msra.mxu0 0
        %1007 = vmatprep.subr.bf16.mxu0 0
        %1008 = vmatpush1.bf16.msra.mxu0 0
        %1009 = vmatprep.subr.bf16.mxu0 0
        %1010 = vmatpush1.bf16.msra.mxu0 0
        %1011 = vmatprep.subr.bf16.mxu0 0
        %1012 = vmatpush1.bf16.msra.mxu0 0
        %1013 = vmatprep.mubr.bf16.mxu0 0
        %1014 = vmatmul.mubr.bf16.gmra.mrb[0].mxu0 %v633
        %v1015 = vpop.f32.mrb[0].mxu0
        %v1016 = vadd.f32 0.0, %v1015
        %v1017 = vpop.f32.mrb[0].mxu0
        %v1018 = vpop.f32.mrb[0].mxu0
        %v1019 = vpop.f32.mrb[0].mxu0
        %1020 = vdwg.mxu0
        %v1021 = vpack.c.bf16 %v1016, %v1016
        %v1023 = vsel %vm733, %v905, 0
        %v1026 = vsel %vm733, %v963, 0
        %1028 = vmatprep.subr.bf16.mxu0 0
        %1029 = vmatpush1.bf16.xpose.msra.mxu0 %v1026
        %1030 = vmatprep.subr.bf16.mxu0 0
        %1031 = vmatpush1.bf16.xpose.msra.mxu0 0
        %1032 = vmatprep.subr.bf16.mxu0 0
        %1033 = vmatpush1.bf16.xpose.msra.mxu0 0
        %1034 = vmatprep.subr.bf16.mxu0 0
        %1035 = vmatpush1.bf16.xpose.msra.mxu0 0
        %1036 = vmatprep.subr.bf16.mxu0 0
        %1037 = vmatpush1.bf16.xpose.msra.mxu0 0
        %1038 = vmatprep.subr.bf16.mxu0 0
        %1039 = vmatpush1.bf16.xpose.msra.mxu0 0
        %1040 = vmatprep.subr.bf16.mxu0 0
        %1041 = vmatpush1.bf16.xpose.msra.mxu0 0
        %1042 = vmatprep.subr.bf16.mxu0 0
        %1043 = vmatpush1.bf16.xpose.msra.mxu0 0
        %1044 = vmatprep.subr.bf16.mxu0 0
        %1045 = vmatpush1.bf16.xpose.msra.mxu0 0
        %1046 = vmatprep.subr.bf16.mxu0 0
        %1047 = vmatpush1.bf16.xpose.msra.mxu0 0
        %1048 = vmatprep.subr.bf16.mxu0 0
        %1049 = vmatpush1.bf16.xpose.msra.mxu0 0
        %1050 = vmatprep.subr.bf16.mxu0 0
        %1051 = vmatpush1.bf16.xpose.msra.mxu0 0
        %1052 = vmatprep.subr.bf16.mxu0 0
        %1053 = vmatpush1.bf16.xpose.msra.mxu0 0
        %1054 = vmatprep.subr.bf16.mxu0 0
        %1055 = vmatpush1.bf16.xpose.msra.mxu0 0
        %1056 = vmatprep.subr.bf16.mxu0 0
        %1057 = vmatpush1.bf16.xpose.msra.mxu0 0
        %1058 = vmatprep.subr.bf16.mxu0 0
        %1059 = vmatpush1.bf16.xpose.msra.mxu0 0
        %1060 = vmatprep.mubr.bf16.mxu0 0
        %1061 = vmatmul.mubr.bf16.gmra.mrb[0].mxu0 %v1023
        %v1062 = vpop.f32.mrb[0].mxu0
        %v1063 = vadd.f32 0.0, %v1062
        %v1064 = vpop.f32.mrb[0].mxu0
        %v1065 = vpop.f32.mrb[0].mxu0
        %v1066 = vpop.f32.mrb[0].mxu0
        %1067 = vdwg.mxu0
        %v1068 = vmul.f32 %v1063, 0.17677669
        %v1069 = vsel %vm733, %v1068, -inf
        %1070 = vmax.xlane.f32.xlu0 %v1069
        %v1071 = vpop.xlane.xlu0 %1070
        %v1072 = vsub.f32 -inf, %v1071
        %v1073 = vmul.f32 %v1072, 1.442695
        %v1074 = vpow.pop %v1073
        %v1075 = vsub.f32 %v1068, %v1071
        %v1076 = vmul.f32 %v1075, 1.442695
        %v1077 = vpow.pop %v1076
        %v1078 = vmul.f32 %v1074, 0.0
        %v1079 = vsel %vm733, %v1077, 0.0
        %1080 = vadd.xlane.f32.xlu0 %v1079
        %v1081 = vpop.xlane.xlu0 %1080
        %v1082 = vadd.f32 %v1078, %v1081
        %v1083 = vpack.c.bf16 %v1077, %v1077
        %v1085 = vsel %vm733, %v1083, 0
        %v1088 = vsel %vm799, %v1021, 0
        %1090 = vmatprep.subr.bf16.mxu0 0
        %1091 = vmatpush1.bf16.msra.mxu0 %v1088
        %1092 = vmatprep.subr.bf16.mxu0 0
        %1093 = vmatpush1.bf16.msra.mxu0 0
        %1094 = vmatprep.subr.bf16.mxu0 0
        %1095 = vmatpush1.bf16.msra.mxu0 0
        %1096 = vmatprep.subr.bf16.mxu0 0
        %1097 = vmatpush1.bf16.msra.mxu0 0
        %1098 = vmatprep.subr.bf16.mxu0 0
        %1099 = vmatpush1.bf16.msra.mxu0 0
        %1100 = vmatprep.subr.bf16.mxu0 0
        %1101 = vmatpush1.bf16.msra.mxu0 0
        %1102 = vmatprep.subr.bf16.mxu0 0
        %1103 = vmatpush1.bf16.msra.mxu0 0
        %1104 = vmatprep.subr.bf16.mxu0 0
        %1105 = vmatpush1.bf16.msra.mxu0 0
        %1106 = vmatprep.subr.bf16.mxu0 0
        %1107 = vmatpush1.bf16.msra.mxu0 0
        %1108 = vmatprep.subr.bf16.mxu0 0
        %1109 = vmatpush1.bf16.msra.mxu0 0
        %1110 = vmatprep.subr.bf16.mxu0 0
        %1111 = vmatpush1.bf16.msra.mxu0 0
        %1112 = vmatprep.subr.bf16.mxu0 0
        %1113 = vmatpush1.bf16.msra.mxu0 0
        %1114 = vmatprep.subr.bf16.mxu0 0
        %1115 = vmatpush1.bf16.msra.mxu0 0
        %1116 = vmatprep.subr.bf16.mxu0 0
        %1117 = vmatpush1.bf16.msra.mxu0 0
        %1118 = vmatprep.subr.bf16.mxu0 0
        %1119 = vmatpush1.bf16.msra.mxu0 0
        %1120 = vmatprep.subr.bf16.mxu0 0
        %1121 = vmatpush1.bf16.msra.mxu0 0
        %1122 = vmatprep.mubr.bf16.mxu0 0
        %1123 = vmatmul.mubr.bf16.gmra.mrb[0].mxu0 %v1085
        %v1124 = vpop.f32.mrb[0].mxu0
        %v1125 = vadd.f32 0.0, %v1124
        %v1126 = vpop.f32.mrb[0].mxu0
        %v1127 = vpop.f32.mrb[0].mxu0
        %v1128 = vpop.f32.mrb[0].mxu0
        %1129 = vdwg.mxu0
        %v1130 = vadd.f32 %v1078, %v1125
        %v1131 = vrcp.pop %v1082
        %v1132 = vmul.f32 %v1130, %v1131
        %v1133 = vpack.c.bf16 %v1132, %v1132
        %s1134 = scalar_lea.vmem %s7, 4
        %v1135 = vld [vmem:[%s1134] sm:$0xf]
        %v1137 = vsel %vm733, %v1133, 0
        %v1140 = vsel %vm799, %v1135, 0
        %1142 = vmatprep.subr.bf16.mxu0 0
        %1143 = vmatpush1.bf16.msra.mxu0 %v1140
        %1144 = vmatprep.subr.bf16.mxu0 0
        %1145 = vmatpush1.bf16.msra.mxu0 0
        %1146 = vmatprep.subr.bf16.mxu0 0
        %1147 = vmatpush1.bf16.msra.mxu0 0
        %1148 = vmatprep.subr.bf16.mxu0 0
        %1149 = vmatpush1.bf16.msra.mxu0 0
        %1150 = vmatprep.subr.bf16.mxu0 0
        %1151 = vmatpush1.bf16.msra.mxu0 0
        %1152 = vmatprep.subr.bf16.mxu0 0
        %1153 = vmatpush1.bf16.msra.mxu0 0
        %1154 = vmatprep.subr.bf16.mxu0 0
        %1155 = vmatpush1.bf16.msra.mxu0 0
        %1156 = vmatprep.subr.bf16.mxu0 0
        %1157 = vmatpush1.bf16.msra.mxu0 0
        %1158 = vmatprep.subr.bf16.mxu0 0
        %1159 = vmatpush1.bf16.msra.mxu0 0
        %1160 = vmatprep.subr.bf16.mxu0 0
        %1161 = vmatpush1.bf16.msra.mxu0 0
        %1162 = vmatprep.subr.bf16.mxu0 0
        %1163 = vmatpush1.bf16.msra.mxu0 0
        %1164 = vmatprep.subr.bf16.mxu0 0
        %1165 = vmatpush1.bf16.msra.mxu0 0
        %1166 = vmatprep.subr.bf16.mxu0 0
        %1167 = vmatpush1.bf16.msra.mxu0 0
        %1168 = vmatprep.subr.bf16.mxu0 0
        %1169 = vmatpush1.bf16.msra.mxu0 0
        %1170 = vmatprep.subr.bf16.mxu0 0
        %1171 = vmatpush1.bf16.msra.mxu0 0
        %1172 = vmatprep.subr.bf16.mxu0 0
        %1173 = vmatpush1.bf16.msra.mxu0 0
        %1174 = vmatprep.mubr.bf16.mxu0 0
        %1175 = vmatmul.mubr.bf16.gmra.mrb[0].mxu0 %v1137
        %v1176 = vpop.f32.mrb[0].mxu0
        %v1177 = vadd.f32 0.0, %v1176
        %v1178 = vpop.f32.mrb[0].mxu0
        %v1179 = vpop.f32.mrb[0].mxu0
        %v1180 = vpop.f32.mrb[0].mxu0
        %1181 = vdwg.mxu0
        %v1183 = vsel %vm733, %v846, 0
        %v1186 = vsel %vm799, %v847, 0
        %1188 = vmatprep.subr.bf16.mxu0 0
        %1189 = vmatpush1.bf16.msra.mxu0 %v1186
        %1190 = vmatprep.subr.bf16.mxu0 0
        %1191 = vmatpush1.bf16.msra.mxu0 0
        %1192 = vmatprep.subr.bf16.mxu0 0
        %1193 = vmatpush1.bf16.msra.mxu0 0
        %1194 = vmatprep.subr.bf16.mxu0 0
        %1195 = vmatpush1.bf16.msra.mxu0 0
        %1196 = vmatprep.subr.bf16.mxu0 0
        %1197 = vmatpush1.bf16.msra.mxu0 0
        %1198 = vmatprep.subr.bf16.mxu0 0
        %1199 = vmatpush1.bf16.msra.mxu0 0
        %1200 = vmatprep.subr.bf16.mxu0 0
        %1201 = vmatpush1.bf16.msra.mxu0 0
        %1202 = vmatprep.subr.bf16.mxu0 0
        %1203 = vmatpush1.bf16.msra.mxu0 0
        %1204 = vmatprep.subr.bf16.mxu0 0
        %1205 = vmatpush1.bf16.msra.mxu0 0
        %1206 = vmatprep.subr.bf16.mxu0 0
        %1207 = vmatpush1.bf16.msra.mxu0 0
        %1208 = vmatprep.subr.bf16.mxu0 0
        %1209 = vmatpush1.bf16.msra.mxu0 0
        %1210 = vmatprep.subr.bf16.mxu0 0
        %1211 = vmatpush1.bf16.msra.mxu0 0
        %1212 = vmatprep.subr.bf16.mxu0 0
        %1213 = vmatpush1.bf16.msra.mxu0 0
        %1214 = vmatprep.subr.bf16.mxu0 0
        %1215 = vmatpush1.bf16.msra.mxu0 0
        %1216 = vmatprep.subr.bf16.mxu0 0
        %1217 = vmatpush1.bf16.msra.mxu0 0
        %1218 = vmatprep.subr.bf16.mxu0 0
        %1219 = vmatpush1.bf16.msra.mxu0 0
        %1220 = vmatprep.mubr.bf16.mxu0 0
        %1221 = vmatmul.mubr.bf16.gmra.mrb[0].mxu0 %v1183
        %v1222 = vpop.f32.mrb[0].mxu0
        %v1223 = vadd.f32 %v1177, %v1222
        %v1224 = vpop.f32.mrb[0].mxu0
        %v1225 = vpop.f32.mrb[0].mxu0
        %v1226 = vpop.f32.mrb[0].mxu0
        %1227 = vdwg.mxu0
        %s1228 = scalar_lea.vmem %s4, 32
        %v1229 = vld [vmem:[%s1228] sm:$0xf]
        %v1230 = vld [vmem:[%s1228 + $0x4] sm:$0xf]
        %v1231 = vld [vmem:[%s1228 + $0x8] sm:$0xf]
        %v1232 = vld [vmem:[%s1228 + $0xc] sm:$0xf]
        %v1237 = vunpack.c.l.b16 %v1229
        %v1238 = vunpack.c.l.b16 %v1230
        %v1239 = vunpack.c.l.b16 %v1231
        %v1240 = vunpack.c.l.b16 %v1232
        %v1241 = vpack.c.b16 %v1238, %v1237
        %v1242 = vpack.c.b16 %v1240, %v1239
        %1245 = vmatprep.subr.bf16.mxu0 0
        %1246 = vmatpush1.bf16.msra.mxu0 %v1241
        %1247 = vmatprep.subr.bf16.mxu0 0
        %1248 = vmatpush1.bf16.msra.mxu0 %v1242
        %1249 = vmatprep.subr.bf16.mxu0 0
        %1250 = vmatpush1.bf16.msra.mxu0 0
        %1251 = vmatprep.subr.bf16.mxu0 0
        %1252 = vmatpush1.bf16.msra.mxu0 0
        %1253 = vmatprep.subr.bf16.mxu0 0
        %1254 = vmatpush1.bf16.msra.mxu0 0
        %1255 = vmatprep.subr.bf16.mxu0 0
        %1256 = vmatpush1.bf16.msra.mxu0 0
        %1257 = vmatprep.subr.bf16.mxu0 0
        %1258 = vmatpush1.bf16.msra.mxu0 0
        %1259 = vmatprep.subr.bf16.mxu0 0
        %1260 = vmatpush1.bf16.msra.mxu0 0
        %1261 = vmatprep.subr.bf16.mxu0 0
        %1262 = vmatpush1.bf16.msra.mxu0 0
        %1263 = vmatprep.subr.bf16.mxu0 0
        %1264 = vmatpush1.bf16.msra.mxu0 0
        %1265 = vmatprep.subr.bf16.mxu0 0
        %1266 = vmatpush1.bf16.msra.mxu0 0
        %1267 = vmatprep.subr.bf16.mxu0 0
        %1268 = vmatpush1.bf16.msra.mxu0 0
        %1269 = vmatprep.subr.bf16.mxu0 0
        %1270 = vmatpush1.bf16.msra.mxu0 0
        %1271 = vmatprep.subr.bf16.mxu0 0
        %1272 = vmatpush1.bf16.msra.mxu0 0
        %1273 = vmatprep.subr.bf16.mxu0 0
        %1274 = vmatpush1.bf16.msra.mxu0 0
        %1275 = vmatprep.subr.bf16.mxu0 0
        %1276 = vmatpush1.bf16.msra.mxu0 0
        %1277 = vmatprep.mubr.bf16.mxu0 0
        %1278 = vmatmul.mubr.bf16.gmra.mrb[0].mxu0 %v573
        %v1279 = vpop.f32.mrb[0].mxu0
        %v1280 = vadd.f32 0.0, %v1279
        %v1281 = vpop.f32.mrb[0].mxu0
        %v1282 = vpop.f32.mrb[0].mxu0
        %v1283 = vpop.f32.mrb[0].mxu0
        %1284 = vdwg.mxu0
        %v1285 = vpack.c.bf16 %v1280, %v1280
        %s1286 = scalar_lea.vmem %s5, 32
        %v1287 = vld [vmem:[%s1286] sm:$0xf]
        %v1288 = vld [vmem:[%s1286 + $0x4] sm:$0xf]
        %v1289 = vld [vmem:[%s1286 + $0x8] sm:$0xf]
        %v1290 = vld [vmem:[%s1286 + $0xc] sm:$0xf]
        %v1295 = vunpack.c.l.b16 %v1287
        %v1296 = vunpack.c.l.b16 %v1288
        %v1297 = vunpack.c.l.b16 %v1289
        %v1298 = vunpack.c.l.b16 %v1290
        %v1299 = vpack.c.b16 %v1296, %v1295
        %v1300 = vpack.c.b16 %v1298, %v1297
        %1303 = vmatprep.subr.bf16.mxu0 0
        %1304 = vmatpush1.bf16.msra.mxu0 %v1299
        %1305 = vmatprep.subr.bf16.mxu0 0
        %1306 = vmatpush1.bf16.msra.mxu0 %v1300
        %1307 = vmatprep.subr.bf16.mxu0 0
        %1308 = vmatpush1.bf16.msra.mxu0 0
        %1309 = vmatprep.subr.bf16.mxu0 0
        %1310 = vmatpush1.bf16.msra.mxu0 0
        %1311 = vmatprep.subr.bf16.mxu0 0
        %1312 = vmatpush1.bf16.msra.mxu0 0
        %1313 = vmatprep.subr.bf16.mxu0 0
        %1314 = vmatpush1.bf16.msra.mxu0 0
        %1315 = vmatprep.subr.bf16.mxu0 0
        %1316 = vmatpush1.bf16.msra.mxu0 0
        %1317 = vmatprep.subr.bf16.mxu0 0
        %1318 = vmatpush1.bf16.msra.mxu0 0
        %1319 = vmatprep.subr.bf16.mxu0 0
        %1320 = vmatpush1.bf16.msra.mxu0 0
        %1321 = vmatprep.subr.bf16.mxu0 0
        %1322 = vmatpush1.bf16.msra.mxu0 0
        %1323 = vmatprep.subr.bf16.mxu0 0
        %1324 = vmatpush1.bf16.msra.mxu0 0
        %1325 = vmatprep.subr.bf16.mxu0 0
        %1326 = vmatpush1.bf16.msra.mxu0 0
        %1327 = vmatprep.subr.bf16.mxu0 0
        %1328 = vmatpush1.bf16.msra.mxu0 0
        %1329 = vmatprep.subr.bf16.mxu0 0
        %1330 = vmatpush1.bf16.msra.mxu0 0
        %1331 = vmatprep.subr.bf16.mxu0 0
        %1332 = vmatpush1.bf16.msra.mxu0 0
        %1333 = vmatprep.subr.bf16.mxu0 0
        %1334 = vmatpush1.bf16.msra.mxu0 0
        %1335 = vmatprep.mubr.bf16.mxu0 0
        %1336 = vmatmul.mubr.bf16.gmra.mrb[0].mxu0 %v633
        %v1337 = vpop.f32.mrb[0].mxu0
        %v1338 = vadd.f32 0.0, %v1337
        %v1339 = vpop.f32.mrb[0].mxu0
        %v1340 = vpop.f32.mrb[0].mxu0
        %v1341 = vpop.f32.mrb[0].mxu0
        %1342 = vdwg.mxu0
        %v1343 = vpack.c.bf16 %v1338, %v1338
        %s1344 = scalar_lea.vmem %s6, 32
        %v1345 = vld [vmem:[%s1344] sm:$0xf]
        %v1346 = vld [vmem:[%s1344 + $0x4] sm:$0xf]
        %v1347 = vld [vmem:[%s1344 + $0x8] sm:$0xf]
        %v1348 = vld [vmem:[%s1344 + $0xc] sm:$0xf]
        %v1353 = vunpack.c.l.b16 %v1345
        %v1354 = vunpack.c.l.b16 %v1346
        %v1355 = vunpack.c.l.b16 %v1347
        %v1356 = vunpack.c.l.b16 %v1348
        %v1357 = vpack.c.b16 %v1354, %v1353
        %v1358 = vpack.c.b16 %v1356, %v1355
        %1361 = vmatprep.subr.bf16.mxu0 0
        %1362 = vmatpush1.bf16.msra.mxu0 %v1357
        %1363 = vmatprep.subr.bf16.mxu0 0
        %1364 = vmatpush1.bf16.msra.mxu0 %v1358
        %1365 = vmatprep.subr.bf16.mxu0 0
        %1366 = vmatpush1.bf16.msra.mxu0 0
        %1367 = vmatprep.subr.bf16.mxu0 0
        %1368 = vmatpush1.bf16.msra.mxu0 0
        %1369 = vmatprep.subr.bf16.mxu0 0
        %1370 = vmatpush1.bf16.msra.mxu0 0
        %1371 = vmatprep.subr.bf16.mxu0 0
        %1372 = vmatpush1.bf16.msra.mxu0 0
        %1373 = vmatprep.subr.bf16.mxu0 0
        %1374 = vmatpush1.bf16.msra.mxu0 0
        %1375 = vmatprep.subr.bf16.mxu0 0
        %1376 = vmatpush1.bf16.msra.mxu0 0
        %1377 = vmatprep.subr.bf16.mxu0 0
        %1378 = vmatpush1.bf16.msra.mxu0 0
        %1379 = vmatprep.subr.bf16.mxu0 0
        %1380 = vmatpush1.bf16.msra.mxu0 0
        %1381 = vmatprep.subr.bf16.mxu0 0
        %1382 = vmatpush1.bf16.msra.mxu0 0
        %1383 = vmatprep.subr.bf16.mxu0 0
        %1384 = vmatpush1.bf16.msra.mxu0 0
        %1385 = vmatprep.subr.bf16.mxu0 0
        %1386 = vmatpush1.bf16.msra.mxu0 0
        %1387 = vmatprep.subr.bf16.mxu0 0
        %1388 = vmatpush1.bf16.msra.mxu0 0
        %1389 = vmatprep.subr.bf16.mxu0 0
        %1390 = vmatpush1.bf16.msra.mxu0 0
        %1391 = vmatprep.subr.bf16.mxu0 0
        %1392 = vmatpush1.bf16.msra.mxu0 0
        %1393 = vmatprep.mubr.bf16.mxu0 0
        %1394 = vmatmul.mubr.bf16.gmra.mrb[0].mxu0 %v633
        %v1395 = vpop.f32.mrb[0].mxu0
        %v1396 = vadd.f32 0.0, %v1395
        %v1397 = vpop.f32.mrb[0].mxu0
        %v1398 = vpop.f32.mrb[0].mxu0
        %v1399 = vpop.f32.mrb[0].mxu0
        %1400 = vdwg.mxu0
        %v1401 = vpack.c.bf16 %v1396, %v1396
        %v1403 = vsel %vm733, %v1285, 0
        %v1406 = vsel %vm733, %v1343, 0
        %1408 = vmatprep.subr.bf16.mxu0 0
        %1409 = vmatpush1.bf16.xpose.msra.mxu0 %v1406
        %1410 = vmatprep.subr.bf16.mxu0 0
        %1411 = vmatpush1.bf16.xpose.msra.mxu0 0
        %1412 = vmatprep.subr.bf16.mxu0 0
        %1413 = vmatpush1.bf16.xpose.msra.mxu0 0
        %1414 = vmatprep.subr.bf16.mxu0 0
        %1415 = vmatpush1.bf16.xpose.msra.mxu0 0
        %1416 = vmatprep.subr.bf16.mxu0 0
        %1417 = vmatpush1.bf16.xpose.msra.mxu0 0
        %1418 = vmatprep.subr.bf16.mxu0 0
        %1419 = vmatpush1.bf16.xpose.msra.mxu0 0
        %1420 = vmatprep.subr.bf16.mxu0 0
        %1421 = vmatpush1.bf16.xpose.msra.mxu0 0
        %1422 = vmatprep.subr.bf16.mxu0 0
        %1423 = vmatpush1.bf16.xpose.msra.mxu0 0
        %1424 = vmatprep.subr.bf16.mxu0 0
        %1425 = vmatpush1.bf16.xpose.msra.mxu0 0
        %1426 = vmatprep.subr.bf16.mxu0 0
        %1427 = vmatpush1.bf16.xpose.msra.mxu0 0
        %1428 = vmatprep.subr.bf16.mxu0 0
        %1429 = vmatpush1.bf16.xpose.msra.mxu0 0
        %1430 = vmatprep.subr.bf16.mxu0 0
        %1431 = vmatpush1.bf16.xpose.msra.mxu0 0
        %1432 = vmatprep.subr.bf16.mxu0 0
        %1433 = vmatpush1.bf16.xpose.msra.mxu0 0
        %1434 = vmatprep.subr.bf16.mxu0 0
        %1435 = vmatpush1.bf16.xpose.msra.mxu0 0
        %1436 = vmatprep.subr.bf16.mxu0 0
        %1437 = vmatpush1.bf16.xpose.msra.mxu0 0
        %1438 = vmatprep.subr.bf16.mxu0 0
        %1439 = vmatpush1.bf16.xpose.msra.mxu0 0
        %1440 = vmatprep.mubr.bf16.mxu0 0
        %1441 = vmatmul.mubr.bf16.gmra.mrb[0].mxu0 %v1403
        %v1442 = vpop.f32.mrb[0].mxu0
        %v1443 = vadd.f32 0.0, %v1442
        %v1444 = vpop.f32.mrb[0].mxu0
        %v1445 = vpop.f32.mrb[0].mxu0
        %v1446 = vpop.f32.mrb[0].mxu0
        %1447 = vdwg.mxu0
        %v1448 = vmul.f32 %v1443, 0.17677669
        %v1449 = vsel %vm733, %v1448, -inf
        %1450 = vmax.xlane.f32.xlu0 %v1449
        %v1451 = vpop.xlane.xlu0 %1450
        %v1452 = vsub.f32 -inf, %v1451
        %v1453 = vmul.f32 %v1452, 1.442695
        %v1454 = vpow.pop %v1453
        %v1455 = vsub.f32 %v1448, %v1451
        %v1456 = vmul.f32 %v1455, 1.442695
        %v1457 = vpow.pop %v1456
        %v1458 = vmul.f32 %v1454, 0.0
        %v1459 = vsel %vm733, %v1457, 0.0
        %1460 = vadd.xlane.f32.xlu0 %v1459
        %v1461 = vpop.xlane.xlu0 %1460
        %v1462 = vadd.f32 %v1458, %v1461
        %v1463 = vpack.c.bf16 %v1457, %v1457
        %v1465 = vsel %vm733, %v1463, 0
        %v1468 = vsel %vm799, %v1401, 0
        %1470 = vmatprep.subr.bf16.mxu0 0
        %1471 = vmatpush1.bf16.msra.mxu0 %v1468
        %1472 = vmatprep.subr.bf16.mxu0 0
        %1473 = vmatpush1.bf16.msra.mxu0 0
        %1474 = vmatprep.subr.bf16.mxu0 0
        %1475 = vmatpush1.bf16.msra.mxu0 0
        %1476 = vmatprep.subr.bf16.mxu0 0
        %1477 = vmatpush1.bf16.msra.mxu0 0
        %1478 = vmatprep.subr.bf16.mxu0 0
        %1479 = vmatpush1.bf16.msra.mxu0 0
        %1480 = vmatprep.subr.bf16.mxu0 0
        %1481 = vmatpush1.bf16.msra.mxu0 0
        %1482 = vmatprep.subr.bf16.mxu0 0
        %1483 = vmatpush1.bf16.msra.mxu0 0
        %1484 = vmatprep.subr.bf16.mxu0 0
        %1485 = vmatpush1.bf16.msra.mxu0 0
        %1486 = vmatprep.subr.bf16.mxu0 0
        %1487 = vmatpush1.bf16.msra.mxu0 0
        %1488 = vmatprep.subr.bf16.mxu0 0
        %1489 = vmatpush1.bf16.msra.mxu0 0
        %1490 = vmatprep.subr.bf16.mxu0 0
        %1491 = vmatpush1.bf16.msra.mxu0 0
        %1492 = vmatprep.subr.bf16.mxu0 0
        %1493 = vmatpush1.bf16.msra.mxu0 0
        %1494 = vmatprep.subr.bf16.mxu0 0
        %1495 = vmatpush1.bf16.msra.mxu0 0
        %1496 = vmatprep.subr.bf16.mxu0 0
        %1497 = vmatpush1.bf16.msra.mxu0 0
        %1498 = vmatprep.subr.bf16.mxu0 0
        %1499 = vmatpush1.bf16.msra.mxu0 0
        %1500 = vmatprep.subr.bf16.mxu0 0
        %1501 = vmatpush1.bf16.msra.mxu0 0
        %1502 = vmatprep.mubr.bf16.mxu0 0
        %1503 = vmatmul.mubr.bf16.gmra.mrb[0].mxu0 %v1465
        %v1504 = vpop.f32.mrb[0].mxu0
        %v1505 = vadd.f32 0.0, %v1504
        %v1506 = vpop.f32.mrb[0].mxu0
        %v1507 = vpop.f32.mrb[0].mxu0
        %v1508 = vpop.f32.mrb[0].mxu0
        %1509 = vdwg.mxu0
        %v1510 = vadd.f32 %v1458, %v1505
        %v1511 = vrcp.pop %v1462
        %v1512 = vmul.f32 %v1510, %v1511
        %v1513 = vpack.c.bf16 %v1512, %v1512
        %s1514 = scalar_lea.vmem %s7, 8
        %v1515 = vld [vmem:[%s1514] sm:$0xf]
        %v1517 = vsel %vm733, %v1513, 0
        %v1520 = vsel %vm799, %v1515, 0
        %1522 = vmatprep.subr.bf16.mxu0 0
        %1523 = vmatpush1.bf16.msra.mxu0 %v1520
        %1524 = vmatprep.subr.bf16.mxu0 0
        %1525 = vmatpush1.bf16.msra.mxu0 0
        %1526 = vmatprep.subr.bf16.mxu0 0
        %1527 = vmatpush1.bf16.msra.mxu0 0
        %1528 = vmatprep.subr.bf16.mxu0 0
        %1529 = vmatpush1.bf16.msra.mxu0 0
        %1530 = vmatprep.subr.bf16.mxu0 0
        %1531 = vmatpush1.bf16.msra.mxu0 0
        %1532 = vmatprep.subr.bf16.mxu0 0
        %1533 = vmatpush1.bf16.msra.mxu0 0
        %1534 = vmatprep.subr.bf16.mxu0 0
        %1535 = vmatpush1.bf16.msra.mxu0 0
        %1536 = vmatprep.subr.bf16.mxu0 0
        %1537 = vmatpush1.bf16.msra.mxu0 0
        %1538 = vmatprep.subr.bf16.mxu0 0
        %1539 = vmatpush1.bf16.msra.mxu0 0
        %1540 = vmatprep.subr.bf16.mxu0 0
        %1541 = vmatpush1.bf16.msra.mxu0 0
        %1542 = vmatprep.subr.bf16.mxu0 0
        %1543 = vmatpush1.bf16.msra.mxu0 0
        %1544 = vmatprep.subr.bf16.mxu0 0
        %1545 = vmatpush1.bf16.msra.mxu0 0
        %1546 = vmatprep.subr.bf16.mxu0 0
        %1547 = vmatpush1.bf16.msra.mxu0 0
        %1548 = vmatprep.subr.bf16.mxu0 0
        %1549 = vmatpush1.bf16.msra.mxu0 0
        %1550 = vmatprep.subr.bf16.mxu0 0
        %1551 = vmatpush1.bf16.msra.mxu0 0
        %1552 = vmatprep.subr.bf16.mxu0 0
        %1553 = vmatpush1.bf16.msra.mxu0 0
        %1554 = vmatprep.mubr.bf16.mxu0 0
        %1555 = vmatmul.mubr.bf16.gmra.mrb[0].mxu0 %v1517
        %v1556 = vpop.f32.mrb[0].mxu0
        %v1557 = vadd.f32 0.0, %v1556
        %v1558 = vpop.f32.mrb[0].mxu0
        %v1559 = vpop.f32.mrb[0].mxu0
        %v1560 = vpop.f32.mrb[0].mxu0
        %1561 = vdwg.mxu0
        %v1562 = vadd.f32 %v1223, %v1557
        %s1563 = scalar_lea.vmem %s4, 48
        %v1564 = vld [vmem:[%s1563] sm:$0xf]
        %v1565 = vld [vmem:[%s1563 + $0x4] sm:$0xf]
        %v1566 = vld [vmem:[%s1563 + $0x8] sm:$0xf]
        %v1567 = vld [vmem:[%s1563 + $0xc] sm:$0xf]
        %v1572 = vunpack.c.l.b16 %v1564
        %v1573 = vunpack.c.l.b16 %v1565
        %v1574 = vunpack.c.l.b16 %v1566
        %v1575 = vunpack.c.l.b16 %v1567
        %v1576 = vpack.c.b16 %v1573, %v1572
        %v1577 = vpack.c.b16 %v1575, %v1574
        %1580 = vmatprep.subr.bf16.mxu0 0
        %1581 = vmatpush1.bf16.msra.mxu0 %v1576
        %1582 = vmatprep.subr.bf16.mxu0 0
        %1583 = vmatpush1.bf16.msra.mxu0 %v1577
        %1584 = vmatprep.subr.bf16.mxu0 0
        %1585 = vmatpush1.bf16.msra.mxu0 0
        %1586 = vmatprep.subr.bf16.mxu0 0
        %1587 = vmatpush1.bf16.msra.mxu0 0
        %1588 = vmatprep.subr.bf16.mxu0 0
        %1589 = vmatpush1.bf16.msra.mxu0 0
        %1590 = vmatprep.subr.bf16.mxu0 0
        %1591 = vmatpush1.bf16.msra.mxu0 0
        %1592 = vmatprep.subr.bf16.mxu0 0
        %1593 = vmatpush1.bf16.msra.mxu0 0
        %1594 = vmatprep.subr.bf16.mxu0 0
        %1595 = vmatpush1.bf16.msra.mxu0 0
        %1596 = vmatprep.subr.bf16.mxu0 0
        %1597 = vmatpush1.bf16.msra.mxu0 0
        %1598 = vmatprep.subr.bf16.mxu0 0
        %1599 = vmatpush1.bf16.msra.mxu0 0
        %1600 = vmatprep.subr.bf16.mxu0 0
        %1601 = vmatpush1.bf16.msra.mxu0 0
        %1602 = vmatprep.subr.bf16.mxu0 0
        %1603 = vmatpush1.bf16.msra.mxu0 0
        %1604 = vmatprep.subr.bf16.mxu0 0
        %1605 = vmatpush1.bf16.msra.mxu0 0
        %1606 = vmatprep.subr.bf16.mxu0 0
        %1607 = vmatpush1.bf16.msra.mxu0 0
        %1608 = vmatprep.subr.bf16.mxu0 0
        %1609 = vmatpush1.bf16.msra.mxu0 0
        %1610 = vmatprep.subr.bf16.mxu0 0
        %1611 = vmatpush1.bf16.msra.mxu0 0
        %1612 = vmatprep.mubr.bf16.mxu0 0
        %1613 = vmatmul.mubr.bf16.gmra.mrb[0].mxu0 %v573
        %v1614 = vpop.f32.mrb[0].mxu0
        %v1615 = vadd.f32 0.0, %v1614
        %v1616 = vpop.f32.mrb[0].mxu0
        %v1617 = vpop.f32.mrb[0].mxu0
        %v1618 = vpop.f32.mrb[0].mxu0
        %1619 = vdwg.mxu0
        %v1620 = vpack.c.bf16 %v1615, %v1615
        %s1621 = scalar_lea.vmem %s5, 48
        %v1622 = vld [vmem:[%s1621] sm:$0xf]
        %v1623 = vld [vmem:[%s1621 + $0x4] sm:$0xf]
        %v1624 = vld [vmem:[%s1621 + $0x8] sm:$0xf]
        %v1625 = vld [vmem:[%s1621 + $0xc] sm:$0xf]
        %v1630 = vunpack.c.l.b16 %v1622
        %v1631 = vunpack.c.l.b16 %v1623
        %v1632 = vunpack.c.l.b16 %v1624
        %v1633 = vunpack.c.l.b16 %v1625
        %v1634 = vpack.c.b16 %v1631, %v1630
        %v1635 = vpack.c.b16 %v1633, %v1632
        %1638 = vmatprep.subr.bf16.mxu0 0
        %1639 = vmatpush1.bf16.msra.mxu0 %v1634
        %1640 = vmatprep.subr.bf16.mxu0 0
        %1641 = vmatpush1.bf16.msra.mxu0 %v1635
        %1642 = vmatprep.subr.bf16.mxu0 0
        %1643 = vmatpush1.bf16.msra.mxu0 0
        %1644 = vmatprep.subr.bf16.mxu0 0
        %1645 = vmatpush1.bf16.msra.mxu0 0
        %1646 = vmatprep.subr.bf16.mxu0 0
        %1647 = vmatpush1.bf16.msra.mxu0 0
        %1648 = vmatprep.subr.bf16.mxu0 0
        %1649 = vmatpush1.bf16.msra.mxu0 0
        %1650 = vmatprep.subr.bf16.mxu0 0
        %1651 = vmatpush1.bf16.msra.mxu0 0
        %1652 = vmatprep.subr.bf16.mxu0 0
        %1653 = vmatpush1.bf16.msra.mxu0 0
        %1654 = vmatprep.subr.bf16.mxu0 0
        %1655 = vmatpush1.bf16.msra.mxu0 0
        %1656 = vmatprep.subr.bf16.mxu0 0
        %1657 = vmatpush1.bf16.msra.mxu0 0
        %1658 = vmatprep.subr.bf16.mxu0 0
        %1659 = vmatpush1.bf16.msra.mxu0 0
        %1660 = vmatprep.subr.bf16.mxu0 0
        %1661 = vmatpush1.bf16.msra.mxu0 0
        %1662 = vmatprep.subr.bf16.mxu0 0
        %1663 = vmatpush1.bf16.msra.mxu0 0
        %1664 = vmatprep.subr.bf16.mxu0 0
        %1665 = vmatpush1.bf16.msra.mxu0 0
        %1666 = vmatprep.subr.bf16.mxu0 0
        %1667 = vmatpush1.bf16.msra.mxu0 0
        %1668 = vmatprep.subr.bf16.mxu0 0
        %1669 = vmatpush1.bf16.msra.mxu0 0
        %1670 = vmatprep.mubr.bf16.mxu0 0
        %1671 = vmatmul.mubr.bf16.gmra.mrb[0].mxu0 %v633
        %v1672 = vpop.f32.mrb[0].mxu0
        %v1673 = vadd.f32 0.0, %v1672
        %v1674 = vpop.f32.mrb[0].mxu0
        %v1675 = vpop.f32.mrb[0].mxu0
        %v1676 = vpop.f32.mrb[0].mxu0
        %1677 = vdwg.mxu0
        %v1678 = vpack.c.bf16 %v1673, %v1673
        %s1679 = scalar_lea.vmem %s6, 48
        %v1680 = vld [vmem:[%s1679] sm:$0xf]
        %v1681 = vld [vmem:[%s1679 + $0x4] sm:$0xf]
        %v1682 = vld [vmem:[%s1679 + $0x8] sm:$0xf]
        %v1683 = vld [vmem:[%s1679 + $0xc] sm:$0xf]
        %v1688 = vunpack.c.l.b16 %v1680
        %v1689 = vunpack.c.l.b16 %v1681
        %v1690 = vunpack.c.l.b16 %v1682
        %v1691 = vunpack.c.l.b16 %v1683
        %v1692 = vpack.c.b16 %v1689, %v1688
        %v1693 = vpack.c.b16 %v1691, %v1690
        %1696 = vmatprep.subr.bf16.mxu0 0
        %1697 = vmatpush1.bf16.msra.mxu0 %v1692
        %1698 = vmatprep.subr.bf16.mxu0 0
        %1699 = vmatpush1.bf16.msra.mxu0 %v1693
        %1700 = vmatprep.subr.bf16.mxu0 0
        %1701 = vmatpush1.bf16.msra.mxu0 0
        %1702 = vmatprep.subr.bf16.mxu0 0
        %1703 = vmatpush1.bf16.msra.mxu0 0
        %1704 = vmatprep.subr.bf16.mxu0 0
        %1705 = vmatpush1.bf16.msra.mxu0 0
        %1706 = vmatprep.subr.bf16.mxu0 0
        %1707 = vmatpush1.bf16.msra.mxu0 0
        %1708 = vmatprep.subr.bf16.mxu0 0
        %1709 = vmatpush1.bf16.msra.mxu0 0
        %1710 = vmatprep.subr.bf16.mxu0 0
        %1711 = vmatpush1.bf16.msra.mxu0 0
        %1712 = vmatprep.subr.bf16.mxu0 0
        %1713 = vmatpush1.bf16.msra.mxu0 0
        %1714 = vmatprep.subr.bf16.mxu0 0
        %1715 = vmatpush1.bf16.msra.mxu0 0
        %1716 = vmatprep.subr.bf16.mxu0 0
        %1717 = vmatpush1.bf16.msra.mxu0 0
        %1718 = vmatprep.subr.bf16.mxu0 0
        %1719 = vmatpush1.bf16.msra.mxu0 0
        %1720 = vmatprep.subr.bf16.mxu0 0
        %1721 = vmatpush1.bf16.msra.mxu0 0
        %1722 = vmatprep.subr.bf16.mxu0 0
        %1723 = vmatpush1.bf16.msra.mxu0 0
        %1724 = vmatprep.subr.bf16.mxu0 0
        %1725 = vmatpush1.bf16.msra.mxu0 0
        %1726 = vmatprep.subr.bf16.mxu0 0
        %1727 = vmatpush1.bf16.msra.mxu0 0
        %1728 = vmatprep.mubr.bf16.mxu0 0
        %1729 = vmatmul.mubr.bf16.gmra.mrb[0].mxu0 %v633
        %v1730 = vpop.f32.mrb[0].mxu0
        %v1731 = vadd.f32 0.0, %v1730
        %v1732 = vpop.f32.mrb[0].mxu0
        %v1733 = vpop.f32.mrb[0].mxu0
        %v1734 = vpop.f32.mrb[0].mxu0
        %1735 = vdwg.mxu0
        %v1736 = vpack.c.bf16 %v1731, %v1731
        %v1738 = vsel %vm733, %v1620, 0
        %v1741 = vsel %vm733, %v1678, 0
        %1743 = vmatprep.subr.bf16.mxu0 0
        %1744 = vmatpush1.bf16.xpose.msra.mxu0 %v1741
        %1745 = vmatprep.subr.bf16.mxu0 0
        %1746 = vmatpush1.bf16.xpose.msra.mxu0 0
        %1747 = vmatprep.subr.bf16.mxu0 0
        %1748 = vmatpush1.bf16.xpose.msra.mxu0 0
        %1749 = vmatprep.subr.bf16.mxu0 0
        %1750 = vmatpush1.bf16.xpose.msra.mxu0 0
        %1751 = vmatprep.subr.bf16.mxu0 0
        %1752 = vmatpush1.bf16.xpose.msra.mxu0 0
        %1753 = vmatprep.subr.bf16.mxu0 0
        %1754 = vmatpush1.bf16.xpose.msra.mxu0 0
        %1755 = vmatprep.subr.bf16.mxu0 0
        %1756 = vmatpush1.bf16.xpose.msra.mxu0 0
        %1757 = vmatprep.subr.bf16.mxu0 0
        %1758 = vmatpush1.bf16.xpose.msra.mxu0 0
        %1759 = vmatprep.subr.bf16.mxu0 0
        %1760 = vmatpush1.bf16.xpose.msra.mxu0 0
        %1761 = vmatprep.subr.bf16.mxu0 0
        %1762 = vmatpush1.bf16.xpose.msra.mxu0 0
        %1763 = vmatprep.subr.bf16.mxu0 0
        %1764 = vmatpush1.bf16.xpose.msra.mxu0 0
        %1765 = vmatprep.subr.bf16.mxu0 0
        %1766 = vmatpush1.bf16.xpose.msra.mxu0 0
        %1767 = vmatprep.subr.bf16.mxu0 0
        %1768 = vmatpush1.bf16.xpose.msra.mxu0 0
        %1769 = vmatprep.subr.bf16.mxu0 0
        %1770 = vmatpush1.bf16.xpose.msra.mxu0 0
        %1771 = vmatprep.subr.bf16.mxu0 0
        %1772 = vmatpush1.bf16.xpose.msra.mxu0 0
        %1773 = vmatprep.subr.bf16.mxu0 0
        %1774 = vmatpush1.bf16.xpose.msra.mxu0 0
        %1775 = vmatprep.mubr.bf16.mxu0 0
        %1776 = vmatmul.mubr.bf16.gmra.mrb[0].mxu0 %v1738
        %v1777 = vpop.f32.mrb[0].mxu0
        %v1778 = vadd.f32 0.0, %v1777
        %v1779 = vpop.f32.mrb[0].mxu0
        %v1780 = vpop.f32.mrb[0].mxu0
        %v1781 = vpop.f32.mrb[0].mxu0
        %1782 = vdwg.mxu0
        %v1783 = vmul.f32 %v1778, 0.17677669
        %v1784 = vsel %vm733, %v1783, -inf
        %1785 = vmax.xlane.f32.xlu0 %v1784
        %v1786 = vpop.xlane.xlu0 %1785
        %v1787 = vsub.f32 -inf, %v1786
        %v1788 = vmul.f32 %v1787, 1.442695
        %v1789 = vpow.pop %v1788
        %v1790 = vsub.f32 %v1783, %v1786
        %v1791 = vmul.f32 %v1790, 1.442695
        %v1792 = vpow.pop %v1791
        %v1793 = vmul.f32 %v1789, 0.0
        %v1794 = vsel %vm733, %v1792, 0.0
        %1795 = vadd.xlane.f32.xlu0 %v1794
        %v1796 = vpop.xlane.xlu0 %1795
        %v1797 = vadd.f32 %v1793, %v1796
        %v1798 = vpack.c.bf16 %v1792, %v1792
        %v1800 = vsel %vm733, %v1798, 0
        %v1803 = vsel %vm799, %v1736, 0
        %1805 = vmatprep.subr.bf16.mxu0 0
        %1806 = vmatpush1.bf16.msra.mxu0 %v1803
        %1807 = vmatprep.subr.bf16.mxu0 0
        %1808 = vmatpush1.bf16.msra.mxu0 0
        %1809 = vmatprep.subr.bf16.mxu0 0
        %1810 = vmatpush1.bf16.msra.mxu0 0
        %1811 = vmatprep.subr.bf16.mxu0 0
        %1812 = vmatpush1.bf16.msra.mxu0 0
        %1813 = vmatprep.subr.bf16.mxu0 0
        %1814 = vmatpush1.bf16.msra.mxu0 0
        %1815 = vmatprep.subr.bf16.mxu0 0
        %1816 = vmatpush1.bf16.msra.mxu0 0
        %1817 = vmatprep.subr.bf16.mxu0 0
        %1818 = vmatpush1.bf16.msra.mxu0 0
        %1819 = vmatprep.subr.bf16.mxu0 0
        %1820 = vmatpush1.bf16.msra.mxu0 0
        %1821 = vmatprep.subr.bf16.mxu0 0
        %1822 = vmatpush1.bf16.msra.mxu0 0
        %1823 = vmatprep.subr.bf16.mxu0 0
        %1824 = vmatpush1.bf16.msra.mxu0 0
        %1825 = vmatprep.subr.bf16.mxu0 0
        %1826 = vmatpush1.bf16.msra.mxu0 0
        %1827 = vmatprep.subr.bf16.mxu0 0
        %1828 = vmatpush1.bf16.msra.mxu0 0
        %1829 = vmatprep.subr.bf16.mxu0 0
        %1830 = vmatpush1.bf16.msra.mxu0 0
        %1831 = vmatprep.subr.bf16.mxu0 0
        %1832 = vmatpush1.bf16.msra.mxu0 0
        %1833 = vmatprep.subr.bf16.mxu0 0
        %1834 = vmatpush1.bf16.msra.mxu0 0
        %1835 = vmatprep.subr.bf16.mxu0 0
        %1836 = vmatpush1.bf16.msra.mxu0 0
        %1837 = vmatprep.mubr.bf16.mxu0 0
        %1838 = vmatmul.mubr.bf16.gmra.mrb[0].mxu0 %v1800
        %v1839 = vpop.f32.mrb[0].mxu0
        %v1840 = vadd.f32 0.0, %v1839
        %v1841 = vpop.f32.mrb[0].mxu0
        %v1842 = vpop.f32.mrb[0].mxu0
        %v1843 = vpop.f32.mrb[0].mxu0
        %1844 = vdwg.mxu0
        %v1845 = vadd.f32 %v1793, %v1840
        %v1846 = vrcp.pop %v1797
        %v1847 = vmul.f32 %v1845, %v1846
        %v1848 = vpack.c.bf16 %v1847, %v1847
        %s1849 = scalar_lea.vmem %s7, 12
        %v1850 = vld [vmem:[%s1849] sm:$0xf]
        %v1852 = vsel %vm733, %v1848, 0
        %v1855 = vsel %vm799, %v1850, 0
        %1857 = vmatprep.subr.bf16.mxu0 0
        %1858 = vmatpush1.bf16.msra.mxu0 %v1855
        %1859 = vmatprep.subr.bf16.mxu0 0
        %1860 = vmatpush1.bf16.msra.mxu0 0
        %1861 = vmatprep.subr.bf16.mxu0 0
        %1862 = vmatpush1.bf16.msra.mxu0 0
        %1863 = vmatprep.subr.bf16.mxu0 0
        %1864 = vmatpush1.bf16.msra.mxu0 0
        %1865 = vmatprep.subr.bf16.mxu0 0
        %1866 = vmatpush1.bf16.msra.mxu0 0
        %1867 = vmatprep.subr.bf16.mxu0 0
        %1868 = vmatpush1.bf16.msra.mxu0 0
        %1869 = vmatprep.subr.bf16.mxu0 0
        %1870 = vmatpush1.bf16.msra.mxu0 0
        %1871 = vmatprep.subr.bf16.mxu0 0
        %1872 = vmatpush1.bf16.msra.mxu0 0
        %1873 = vmatprep.subr.bf16.mxu0 0
        %1874 = vmatpush1.bf16.msra.mxu0 0
        %1875 = vmatprep.subr.bf16.mxu0 0
        %1876 = vmatpush1.bf16.msra.mxu0 0
        %1877 = vmatprep.subr.bf16.mxu0 0
        %1878 = vmatpush1.bf16.msra.mxu0 0
        %1879 = vmatprep.subr.bf16.mxu0 0
        %1880 = vmatpush1.bf16.msra.mxu0 0
        %1881 = vmatprep.subr.bf16.mxu0 0
        %1882 = vmatpush1.bf16.msra.mxu0 0
        %1883 = vmatprep.subr.bf16.mxu0 0
        %1884 = vmatpush1.bf16.msra.mxu0 0
        %1885 = vmatprep.subr.bf16.mxu0 0
        %1886 = vmatpush1.bf16.msra.mxu0 0
        %1887 = vmatprep.subr.bf16.mxu0 0
        %1888 = vmatpush1.bf16.msra.mxu0 0
        %1889 = vmatprep.mubr.bf16.mxu0 0
        %1890 = vmatmul.mubr.bf16.gmra.mrb[0].mxu0 %v1852
        %v1891 = vpop.f32.mrb[0].mxu0
        %v1892 = vadd.f32 0.0, %v1891
        %v1893 = vpop.f32.mrb[0].mxu0
        %v1894 = vpop.f32.mrb[0].mxu0
        %v1895 = vpop.f32.mrb[0].mxu0
        %1896 = vdwg.mxu0
        %v1897 = vadd.f32 %v1562, %v1892
        %v1898 = vadd.f32 %v506, %v1897
        %v1899 = vld [vmem:[%s8] sm:$0x1]
        %v1900 = vld [vmem:[%s9] sm:$0x1]
        %v1901 = vsel %vm510, %v1898, 0.0
        %1902 = vadd.xlane.f32.xlu0 %v1901
        %v1903 = vpop.xlane.xlu0 %1902
        %v1904 = vmul.f32 %v1903, %v514
        %v1905 = vsub.f32 %v1898, %v1904
        %v1906 = vmul.f32 %v1905, %v1905
        %v1907 = vsel %vm510, %v1906, 0.0
        %1908 = vadd.xlane.f32.xlu0 %v1907
        %v1909 = vpop.xlane.xlu0 %1908
        %v1910 = vmul.f32 %v1909, %v514
        %v1911 = vadd.f32 %v1910, 1e-05
        %v1912 = vrsqrt.pop %v1911
        %v1913 = vmul.f32 %v1905, %v1912
        %v1915 = vlaneseq
        %v1916 = vshrl.u32 %v1915, 7
        %v1917 = vsub.s32 0, %v1916
        %v1918 = vrot.slane %v1899, %v1917
        %v1920 = vmul.f32 %v1913, %v1918
        %v1922 = vlaneseq
        %v1923 = vshrl.u32 %v1922, 7
        %v1924 = vsub.s32 0, %v1923
        %v1925 = vrot.slane %v1900, %v1924
        %v1927 = vadd.f32 %v1920, %v1925
        %v1928 = vpack.c.bf16 %v1927, %v1927
        %v1929 = vld [vmem:[%s10] sm:$0xf]
        %v1930 = vld [vmem:[%s10 + $0x4] sm:$0xf]
        %v1931 = vld [vmem:[%s10 + $0x8] sm:$0xf]
        %v1932 = vld [vmem:[%s10 + $0xc] sm:$0xf]
        %v1933 = vld [vmem:[%s11] sm:$0x1]
        %v1935 = vlaneseq
        %v1936 = vshrl.u32 %v1935, 7
        %v1937 = vsub.s32 0, %v1936
        %v1938 = vrot.slane %v1933, %v1937
        %v1944 = vunpack.c.l.b16 %v1929
        %v1945 = vunpack.c.l.b16 %v1930
        %v1946 = vunpack.c.l.b16 %v1931
        %v1947 = vunpack.c.l.b16 %v1932
        %v1948 = vpack.c.b16 %v1945, %v1944
        %v1949 = vpack.c.b16 %v1947, %v1946
        %v1953 = vsel %vm510, %v1928, 0
        %1955 = vmatprep.subr.bf16.mxu0 0
        %1956 = vmatpush1.bf16.msra.mxu0 %v1948
        %1957 = vmatprep.subr.bf16.mxu0 0
        %1958 = vmatpush1.bf16.msra.mxu0 %v1949
        %1959 = vmatprep.subr.bf16.mxu0 0
        %1960 = vmatpush1.bf16.msra.mxu0 0
        %1961 = vmatprep.subr.bf16.mxu0 0
        %1962 = vmatpush1.bf16.msra.mxu0 0
        %1963 = vmatprep.subr.bf16.mxu0 0
        %1964 = vmatpush1.bf16.msra.mxu0 0
        %1965 = vmatprep.subr.bf16.mxu0 0
        %1966 = vmatpush1.bf16.msra.mxu0 0
        %1967 = vmatprep.subr.bf16.mxu0 0
        %1968 = vmatpush1.bf16.msra.mxu0 0
        %1969 = vmatprep.subr.bf16.mxu0 0
        %1970 = vmatpush1.bf16.msra.mxu0 0
        %1971 = vmatprep.subr.bf16.mxu0 0
        %1972 = vmatpush1.bf16.msra.mxu0 0
        %1973 = vmatprep.subr.bf16.mxu0 0
        %1974 = vmatpush1.bf16.msra.mxu0 0
        %1975 = vmatprep.subr.bf16.mxu0 0
        %1976 = vmatpush1.bf16.msra.mxu0 0
        %1977 = vmatprep.subr.bf16.mxu0 0
        %1978 = vmatpush1.bf16.msra.mxu0 0
        %1979 = vmatprep.subr.bf16.mxu0 0
        %1980 = vmatpush1.bf16.msra.mxu0 0
        %1981 = vmatprep.subr.bf16.mxu0 0
        %1982 = vmatpush1.bf16.msra.mxu0 0
        %1983 = vmatprep.subr.bf16.mxu0 0
        %1984 = vmatpush1.bf16.msra.mxu0 0
        %1985 = vmatprep.subr.bf16.mxu0 0
        %1986 = vmatpush1.bf16.msra.mxu0 0
        %1987 = vmatprep.mubr.bf16.mxu0 0
        %1988 = vmatmul.mubr.bf16.gmra.mrb[0].mxu0 %v1953
        %v1989 = vpop.f32.mrb[0].mxu0
        %v1990 = vadd.f32 %v1938, %v1989
        %v1991 = vpop.f32.mrb[0].mxu0
        %v1992 = vpop.f32.mrb[0].mxu0
        %v1993 = vpop.f32.mrb[0].mxu0
        %1994 = vdwg.mxu0
        %v1995 = vmax.f32 %v1990, 0.0
        %v1996 = vpack.c.bf16 %v1995, %v1995
        %v1997 = vld [vmem:[%s12] sm:$0xf]
        %v1998 = vld [vmem:[%s12 + $0x4] sm:$0xf]
        %v1999 = vld [vmem:[%s12 + $0x8] sm:$0xf]
        %v2000 = vld [vmem:[%s12 + $0xc] sm:$0xf]
        %v2001 = vld [vmem:[%s12 + $0x10] sm:$0xf]
        %v2002 = vld [vmem:[%s12 + $0x14] sm:$0xf]
        %v2003 = vld [vmem:[%s12 + $0x18] sm:$0xf]
        %v2004 = vld [vmem:[%s12 + $0x1c] sm:$0xf]
        %v2005 = vld [vmem:[%s12 + $0x20] sm:$0xf]
        %v2006 = vld [vmem:[%s12 + $0x24] sm:$0xf]
        %v2007 = vld [vmem:[%s12 + $0x28] sm:$0xf]
        %v2008 = vld [vmem:[%s12 + $0x2c] sm:$0xf]
        %v2009 = vld [vmem:[%s12 + $0x30] sm:$0xf]
        %v2010 = vld [vmem:[%s12 + $0x34] sm:$0xf]
        %v2011 = vld [vmem:[%s12 + $0x38] sm:$0xf]
        %v2012 = vld [vmem:[%s12 + $0x3c] sm:$0xf]
        %v2013 = vld [vmem:[%s13] sm:$0x1]
        %v2015 = vlaneseq
        %v2016 = vshrl.u32 %v2015, 7
        %v2017 = vsub.s32 0, %v2016
        %v2018 = vrot.slane %v2013, %v2017
        %v2036 = vunpack.c.l.b16 %v1997
        %v2037 = vunpack.c.l.b16 %v1998
        %v2038 = vunpack.c.l.b16 %v1999
        %v2039 = vunpack.c.l.b16 %v2000
        %v2040 = vunpack.c.l.b16 %v2001
        %v2041 = vunpack.c.l.b16 %v2002
        %v2042 = vunpack.c.l.b16 %v2003
        %v2043 = vunpack.c.l.b16 %v2004
        %v2044 = vunpack.c.l.b16 %v2005
        %v2045 = vunpack.c.l.b16 %v2006
        %v2046 = vunpack.c.l.b16 %v2007
        %v2047 = vunpack.c.l.b16 %v2008
        %v2048 = vunpack.c.l.b16 %v2009
        %v2049 = vunpack.c.l.b16 %v2010
        %v2050 = vunpack.c.l.b16 %v2011
        %v2051 = vunpack.c.l.b16 %v2012
        %v2052 = vpack.c.b16 %v2037, %v2036
        %v2053 = vpack.c.b16 %v2039, %v2038
        %v2054 = vpack.c.b16 %v2041, %v2040
        %v2055 = vpack.c.b16 %v2043, %v2042
        %v2056 = vpack.c.b16 %v2045, %v2044
        %v2057 = vpack.c.b16 %v2047, %v2046
        %v2058 = vpack.c.b16 %v2049, %v2048
        %v2059 = vpack.c.b16 %v2051, %v2050
        %2068 = vmatprep.subr.bf16.mxu0 0
        %2069 = vmatpush1.bf16.msra.mxu0 %v2052
        %2070 = vmatprep.subr.bf16.mxu0 0
        %2071 = vmatpush1.bf16.msra.mxu0 %v2053
        %2072 = vmatprep.subr.bf16.mxu0 0
        %2073 = vmatpush1.bf16.msra.mxu0 %v2054
        %2074 = vmatprep.subr.bf16.mxu0 0
        %2075 = vmatpush1.bf16.msra.mxu0 %v2055
        %2076 = vmatprep.subr.bf16.mxu0 0
        %2077 = vmatpush1.bf16.msra.mxu0 %v2056
        %2078 = vmatprep.subr.bf16.mxu0 0
        %2079 = vmatpush1.bf16.msra.mxu0 %v2057
        %2080 = vmatprep.subr.bf16.mxu0 0
        %2081 = vmatpush1.bf16.msra.mxu0 %v2058
        %2082 = vmatprep.subr.bf16.mxu0 0
        %2083 = vmatpush1.bf16.msra.mxu0 %v2059
        %2084 = vmatprep.subr.bf16.mxu0 0
        %2085 = vmatpush1.bf16.msra.mxu0 0
        %2086 = vmatprep.subr.bf16.mxu0 0
        %2087 = vmatpush1.bf16.msra.mxu0 0
        %2088 = vmatprep.subr.bf16.mxu0 0
        %2089 = vmatpush1.bf16.msra.mxu0 0
        %2090 = vmatprep.subr.bf16.mxu0 0
        %2091 = vmatpush1.bf16.msra.mxu0 0
        %2092 = vmatprep.subr.bf16.mxu0 0
        %2093 = vmatpush1.bf16.msra.mxu0 0
        %2094 = vmatprep.subr.bf16.mxu0 0
        %2095 = vmatpush1.bf16.msra.mxu0 0
        %2096 = vmatprep.subr.bf16.mxu0 0
        %2097 = vmatpush1.bf16.msra.mxu0 0
        %2098 = vmatprep.subr.bf16.mxu0 0
        %2099 = vmatpush1.bf16.msra.mxu0 0
        %2100 = vmatprep.mubr.bf16.mxu0 0
        %2101 = vmatmul.mubr.bf16.gmra.mrb[0].mxu0 %v1996
        %v2102 = vpop.f32.mrb[0].mxu0
        %v2103 = vadd.f32 %v2018, %v2102
        %v2104 = vpop.f32.mrb[0].mxu0
        %v2105 = vpop.f32.mrb[0].mxu0
        %v2106 = vpop.f32.mrb[0].mxu0
        %2107 = vdwg.mxu0
        %v2108 = vadd.f32 %v1898, %v2103
        %2109 = vst.msk [vmem:[%s493] sm:$0xff] %vm510, %v2108
        %s2110 = sand.u32 %s356, 1
        %s2111 = scalar_lea.sflag [#allocation3], %s2110
        %s2112 = sand.u32 %s356, 1
        %s2113 = smul.addr %s2112, 8
        %s2114 = scalar_lea.vmem [#allocation2], %s2113
        // Predicated region
        $region77: #{tpu_custom_call.1} parent=75 // pred_check
          %p2115 = pneg %p366
        $region78: #{tpu_custom_call.1} parent=75 // pred_check_branch
          %2117 = sbr.rel (%p2115) target = $region80
        $region79: #{tpu_custom_call.1} parent=75 // pred_region
          %s2119 = ssub.s32 128, 128
          %2120 = vsyncadd %s2111, %s2119
          %s2121 = sadd.s32 %s33, %s32
          %s2122 = smul.addr %s2121, 128
          %s2123 = scalar_lea.hbm %s14, %s2122
          %s2125 = sshll.u32 %s2114, 4
          %s2126 = int_to_ptr.vmem [resolvable:$true] %s2125
          %2128 = dma.vmem_to_hbm [thread:$0]  %s2126, 128, %s2123, %s2111
        $region80: #{tpu_custom_call.1} parent=75 // pred_fallthru
          _
      $region76: #{tpu_custom_call.1} parent=5 // pred_fallthru
        _
      %p2129 = scmp.le.s32.totalorder 2, %s23
      // Predicated region
      $region81: #{tpu_custom_call.1} parent=5 // pred_check
        %p2130 = pneg %p2129
      $region82: #{tpu_custom_call.1} parent=5 // pred_check_branch
        %2132 = sbr.rel (%p2130) target = $region84
      $region83: #{tpu_custom_call.1} parent=5 // pred_region
        %s2133 = ssub.s32 %s23, 2
        // Predicated region
        $region85: #{tpu_custom_call.1} parent=83 // pred_check
          %p2134 = pneg %p372
        $region86: #{tpu_custom_call.1} parent=83 // pred_check_branch
          %2136 = sbr.rel (%p2134) target = $region88
        $region87: #{tpu_custom_call.1} parent=83 // pred_region
          %s2137 = sand.u32 %s357, 1
          %s2138 = scalar_lea.sflag [#allocation3], %s2137
          %s2139 = sand.u32 %s357, 1
          %s2140 = smul.addr %s2139, 8
          %s2141 = scalar_lea.vmem [#allocation2], %s2140
          %2142 = dma.done %s2138, 128
        $region88: #{tpu_custom_call.1} parent=83 // pred_fallthru
          _
      $region84: #{tpu_custom_call.1} parent=5 // pred_fallthru
        _
    $region6: #{tpu_custom_call.1} parent=1 // loop_footer
      %s27 = sadd.s32 1, %s23
    $region7: #{tpu_custom_call.1} parent=1 // loop_footer_branch
      %22 = sbr.rel target = $region3
    $region8: #{tpu_custom_call.1} parent=1 // loop_exit
      _
    %2143 = vsyncpa [#allocation3], 1
    %s2144 = scalar_lea.sflag [#allocation3], 1
    %2145 = vsyncpa %s2144, 1

</llo_original>
